<compile_context>
chip_gen: v7x
topology: tpu7x:2x2x1
jax: 0.10.0
libtpu: 0.0.40
codegen_flags: <defaults>
</compile_context>

<pallas_src>
import functools
import math

import jax
import jax.numpy as jnp
from jax import lax
from jax.experimental import pallas as pl
from jax.experimental.pallas import tpu as pltpu


def _pick_tile(n, cap):
    """Largest multiple-of-8 divisor of n that is <= cap."""
    assert n % 8 == 0, "dimension must be a multiple of 8"
    t = min(cap, n)
    t -= t % 8
    while t >= 8:
        if n % t == 0:
            return t
        t -= 8
    return 8


# --------------------------------------------------------------------------
# Kernel 1: LayerNorm + fused QKV projection over flattened (B*N, D) rows.
# The softmax scale is pre-folded into the Q columns of wqkv / bqkv.
# --------------------------------------------------------------------------
def _ln_qkv_kernel(x_ref, gamma_ref, beta_ref, wqkv_ref, bqkv_ref, qkv_ref):
    x = x_ref[...].astype(jnp.float32)                      # (TR, D)
    mean = jnp.mean(x, axis=-1, keepdims=True)
    xc = x - mean
    var = jnp.mean(xc * xc, axis=-1, keepdims=True)
    xn = xc * lax.rsqrt(var + 1e-5)
    xn = xn * gamma_ref[0].astype(jnp.float32) + beta_ref[0].astype(jnp.float32)

    # One fused matmul for Q|K|V: bf16 operands, f32 accumulation on the MXU.
    qkv = jnp.dot(xn.astype(jnp.bfloat16), wqkv_ref[...],
                  preferred_element_type=jnp.float32)
    qkv = qkv + bqkv_ref[0].astype(jnp.float32)
    qkv_ref[...] = qkv.astype(qkv_ref.dtype)


# --------------------------------------------------------------------------
# Kernel 2: causal flash attention.
# Grid = (B, head_pairs, q-tiles); the kv dimension is an in-kernel loop over
# the resident (N, lane) K/V block (online softmax). Two d_head=64 heads are
# packed on the 128-lane axis so the output store is lane-dense.
# --------------------------------------------------------------------------
def _flash_kernel(q_ref, k_ref, v_ref, o_ref, *, d_head, pack, tq):
    qi = pl.program_id(2)
    tk = tq  # equal q/kv tiles => only the block at kv == qi needs the mask

    outs = []
    for h in range(pack):                                   # static unroll
        lo = h * d_head
        q = q_ref[0, :, lo:lo + d_head]                     # (TQ, dh) bf16

        def kv_block(kv_start, m, l, acc, masked):
            k = k_ref[0, pl.ds(kv_start, tk), lo:lo + d_head]   # (TK, dh) bf16
            v = v_ref[0, pl.ds(kv_start, tk), lo:lo + d_head]
            # QK^T without materializing a transpose: contract last dims.
            s = lax.dot_general(q, k, (((1,), (1,)), ((), ())),
                                preferred_element_type=jnp.float32)  # (TQ, TK)
            if masked:
                row = lax.broadcasted_iota(jnp.int32, s.shape, 0)
                col = lax.broadcasted_iota(jnp.int32, s.shape, 1)
                s = jnp.where(row >= col, s, -1e30)          # finite mask
            m_new = jnp.maximum(m, jnp.max(s, axis=-1, keepdims=True))
            alpha = jnp.exp(m - m_new)
            p = jnp.exp(s - m_new)
            l_new = alpha * l + jnp.sum(p, axis=-1, keepdims=True)
            acc_new = alpha * acc + jnp.dot(p.astype(jnp.bfloat16), v,
                                            preferred_element_type=jnp.float32)
            return m_new, l_new, acc_new

        m0 = jnp.full((tq, 1), -1e30, jnp.float32)
        l0 = jnp.zeros((tq, 1), jnp.float32)
        a0 = jnp.zeros((tq, d_head), jnp.float32)

        def body(kv, carry):
            m, l, acc = carry
            start = pl.multiple_of(kv * tk, tk)
            return kv_block(start, m, l, acc, masked=False)

        # Off-diagonal lower-triangle blocks (no mask needed).
        m, l, acc = lax.fori_loop(0, qi, body, (m0, l0, a0))
        # Diagonal block (the only one that needs causal masking).
        diag = pl.multiple_of(qi * tk, tk)
        m, l, acc = kv_block(diag, m, l, acc, masked=True)

        inv_l = pl.reciprocal(l, approx=True)                # EUP slot
        outs.append((acc * inv_l).astype(o_ref.dtype))

    # Single lane-dense (TQ, pack*d_head) store.
    o_ref[0] = outs[0] if pack == 1 else jnp.concatenate(outs, axis=-1)


# --------------------------------------------------------------------------
# Kernel 3: output projection over flattened rows.
# --------------------------------------------------------------------------
def _out_proj_kernel(a_ref, wo_ref, bo_ref, o_ref):
    y = jnp.dot(a_ref[...], wo_ref[...],
                preferred_element_type=jnp.float32)
    y = y + bo_ref[0].astype(jnp.float32)
    o_ref[...] = y.astype(o_ref.dtype)


# --------------------------------------------------------------------------
# Wrapper
# --------------------------------------------------------------------------
def causal_self_attention(x, params, *, n_heads, d_head):
    B, N, D = x.shape
    Hd = n_heads * d_head
    assert N % 8 == 0, "sequence length must be a multiple of 8"
    assert D % 128 == 0 and Hd % 128 == 0, "model dims must be lane-aligned"

    # Head packing so attention blocks are 128 lanes wide.
    if d_head >= 128:
        assert d_head % 128 == 0
        pack = 1
    else:
        assert 128 % d_head == 0
        pack = 128 // d_head
    assert n_heads % pack == 0
    lane = pack * d_head
    HP = Hd // lane                      # number of head-pair blocks

    R = B * N
    TR = _pick_tile(R, 512)              # rows per step for kernels 1 & 3
    TQ = _pick_tile(N, 256)              # q / kv tile for attention
    NQ = N // TQ

    # Fold the softmax scale into the Q projection; fuse QKV weights once.
    scale = 1.0 / math.sqrt(float(d_head))
    wqkv = jnp.concatenate(
        [params["wq"] * scale, params["wk"], params["wv"]],
        axis=1).astype(jnp.bfloat16)
    bqkv = jnp.concatenate(
        [params["bq"] * scale, params["bk"], params["bv"]],
        axis=1).astype(jnp.float32)
    wo = params["wo"].astype(jnp.bfloat16)

    vmem_limit = 32 * 1024 * 1024        # safe on v5e/v6e/v7x

    # ---- Kernel 1: LayerNorm + fused QKV projection ----------------------
    x2 = x.reshape(R, D)
    qkv = pl.pallas_call(
        _ln_qkv_kernel,
        out_shape=jax.ShapeDtypeStruct((R, 3 * Hd), jnp.bfloat16),
        grid_spec=pltpu.PrefetchScalarGridSpec(
            num_scalar_prefetch=0,
            grid=(R // TR,),
            in_specs=[
                pl.BlockSpec((TR, D), lambda i: (i, 0)),        # x rows
                pl.BlockSpec((1, D), lambda i: (0, 0)),         # gamma
                pl.BlockSpec((1, D), lambda i: (0, 0)),         # beta
                pl.BlockSpec((D, 3 * Hd), lambda i: (0, 0)),    # wqkv (bf16)
                pl.BlockSpec((1, 3 * Hd), lambda i: (0, 0)),    # bqkv
            ],
            out_specs=pl.BlockSpec((TR, 3 * Hd), lambda i: (i, 0)),
        ),
        compiler_params=pltpu.CompilerParams(
            dimension_semantics=("parallel",),
            vmem_limit_bytes=vmem_limit),
    )(x2, params["gamma"], params["beta"], wqkv, bqkv)

    # Free (metadata-only) reshape; q/k/v stay interleaved on the lane axis.
    qkv3 = qkv.reshape(B, N, 3 * Hd)

    # ---- Kernel 2: causal flash attention --------------------------------
    flash = functools.partial(_flash_kernel, d_head=d_head, pack=pack, tq=TQ)
    tri = N * (N + 1) // 2
    cost = pl.CostEstimate(
        flops=4 * B * n_heads * d_head * tri,                # QK^T + PV (causal)
        transcendentals=B * n_heads * tri,                   # exp per kept score
        bytes_accessed=2 * (3 * B * N * Hd + B * N * Hd))    # bf16 q,k,v in + o out

    attn = pl.pallas_call(
        flash,
        out_shape=jax.ShapeDtypeStruct((B, N, Hd), jnp.bfloat16),
        grid_spec=pltpu.PrefetchScalarGridSpec(
            num_scalar_prefetch=0,
            grid=(B, HP, NQ),
            in_specs=[
                # Q tile for this head-pair.
                pl.BlockSpec((1, TQ, lane), lambda b, hp, qi: (b, qi, hp)),
                # Full-sequence K / V for this head-pair (resident across qi
                # steps: block index is independent of qi so the DMA is
                # skipped on consecutive steps).
                pl.BlockSpec((1, N, lane), lambda b, hp, qi: (b, 0, HP + hp)),
                pl.BlockSpec((1, N, lane), lambda b, hp, qi: (b, 0, 2 * HP + hp)),
            ],
            out_specs=pl.BlockSpec((1, TQ, lane),
                                   lambda b, hp, qi: (b, qi, hp)),
        ),
        compiler_params=pltpu.CompilerParams(
            dimension_semantics=("parallel", "parallel", "parallel"),
            vmem_limit_bytes=vmem_limit),
        cost_estimate=cost,
    )(qkv3, qkv3, qkv3)

    # ---- Kernel 3: output projection --------------------------------------
    attn2 = attn.reshape(R, Hd)          # free reshape, no transpose
    out2 = pl.pallas_call(
        _out_proj_kernel,
        out_shape=jax.ShapeDtypeStruct((R, D), x.dtype),
        grid_spec=pltpu.PrefetchScalarGridSpec(
            num_scalar_prefetch=0,
            grid=(R // TR,),
            in_specs=[
                pl.BlockSpec((TR, Hd), lambda i: (i, 0)),       # attention out
                pl.BlockSpec((Hd, D), lambda i: (0, 0)),        # wo (bf16)
                pl.BlockSpec((1, D), lambda i: (0, 0)),         # bo
            ],
            out_specs=pl.BlockSpec((TR, D), lambda i: (i, 0)),
        ),
        compiler_params=pltpu.CompilerParams(
            dimension_semantics=("parallel",),
            vmem_limit_bytes=vmem_limit),
    )(attn2, wo, params["bo"])

    return out2.reshape(B, N, D)


# --------------------------------------------------------------------------
# Pure-JAX reference (f32 everywhere), matching the PyTorch forward in eval.
# --------------------------------------------------------------------------
def _reference(x, params, *, n_heads, d_head):
    B, N, D = x.shape
    mean = jnp.mean(x, axis=-1, keepdims=True)
    var = jnp.mean((x - mean) ** 2, axis=-1, keepdims=True)
    xn = (x - mean) / jnp.sqrt(var + 1e-5) * params["gamma"][0] + params["beta"][0]

    def proj(w, b):
        return (xn @ w + b[0]).reshape(B, N, n_heads, d_head)

    q = proj(params["wq"], params["bq"])
    k = proj(params["wk"], params["bk"])
    v = proj(params["wv"], params["bv"])

    scores = jnp.einsum("bihd,bjhd->bhij", q, k) / jnp.sqrt(jnp.float32(d_head))
    mask = jnp.tril(jnp.ones((N, N), dtype=bool))
    scores = jnp.where(mask[None, None], scores, -jnp.inf)
    att = jax.nn.softmax(scores, axis=-1)
    out = jnp.einsum("bhij,bjhd->bihd", att, v).reshape(B, N, n_heads * d_head)
    return out @ params["wo"] + params["bo"][0]


if __name__ == "__main__":
    # Config consistent with the module defaults: d_model=512, 8 heads of 64.
    B, N = 2, 8
    n_heads, d_head = 8, 64
    d_model = 512
    Hd = n_heads * d_head

    key = jax.random.PRNGKey(0)
    ks = jax.random.split(key, 10)

    def init(k, shape, s=0.02):
        return (s * jax.random.normal(k, shape)).astype(jnp.float32)

    params = {
        "gamma": jnp.ones((1, d_model), jnp.float32),
        "beta": jnp.zeros((1, d_model), jnp.float32),
        "wq": init(ks[0], (d_model, Hd)), "bq": init(ks[1], (1, Hd)),
        "wk": init(ks[2], (d_model, Hd)), "bk": init(ks[3], (1, Hd)),
        "wv": init(ks[4], (d_model, Hd)), "bv": init(ks[5], (1, Hd)),
        "wo": init(ks[6], (Hd, d_model)), "bo": init(ks[7], (1, d_model)),
    }

    x = jax.random.normal(ks[8], (B, N, d_model), dtype=jnp.float32)

    out = causal_self_attention(x, params, n_heads=n_heads, d_head=d_head)
    out = jax.block_until_ready(out)

    ref = _reference(x, params, n_heads=n_heads, d_head=d_head)
    assert out.shape == (B, N, d_model)
    assert out.dtype == x.dtype
    # bf16 MXU operands + approx reciprocal => modest tolerance vs f32 reference.
    assert jnp.allclose(out, ref, rtol=2e-2, atol=2e-2), "mismatch vs reference"

    print("KERNEL_OK")
</pallas_src>

<mosaic_0001>
module attributes {stable_mosaic.version = 11 : i64} {
  func.func @_ln_qkv_kernel(%arg0: i32, %arg1: memref<16x512xf32, #tpu.memory_space<vmem>>, %arg2: memref<1x512xf32, #tpu.memory_space<vmem>>, %arg3: memref<1x512xf32, #tpu.memory_space<vmem>>, %arg4: memref<512x1536xbf16, #tpu.memory_space<vmem>>, %arg5: memref<1x1536xf32, #tpu.memory_space<vmem>>, %arg6: memref<16x1536xbf16, #tpu.memory_space<vmem>>) attributes {dimension_semantics = [#tpu.dimension_semantics<parallel>], iteration_bounds = array<i64: 1>, scalar_prefetch = 0 : i64, scratch_operands = 0 : i64, tpu.core_type = #tpu.core_type<tc>, window_params = [{transform_indices = @transform_0, window_bounds = array<i64: 16, 512>}, {pipeline_mode = #tpu.pipeline_mode<synchronous>, transform_indices = @transform_1, window_bounds = array<i64: 1, 512>}, {pipeline_mode = #tpu.pipeline_mode<synchronous>, transform_indices = @transform_2, window_bounds = array<i64: 1, 512>}, {pipeline_mode = #tpu.pipeline_mode<synchronous>, transform_indices = @transform_3, window_bounds = array<i64: 512, 1536>}, {pipeline_mode = #tpu.pipeline_mode<synchronous>, transform_indices = @transform_4, window_bounds = array<i64: 1, 1536>}, {transform_indices = @transform_5, window_bounds = array<i64: 16, 1536>}]} {
    %c0 = arith.constant 0 : index
    %c0_0 = arith.constant 0 : index
    %0 = vector.load %arg1[%c0, %c0_0] : memref<16x512xf32, #tpu.memory_space<vmem>>, vector<16x512xf32>
    %cst = arith.constant dense<0.000000e+00> : vector<16xf32>
    %1 = vector.multi_reduction <add>, %0, %cst [1] : vector<16x512xf32> to vector<16xf32>
    %2 = vector.shape_cast %1 : vector<16xf32> to vector<16x1xf32>
    %cst_1 = arith.constant 5.120000e+02 : f32
    %3 = vector.broadcast %cst_1 : f32 to vector<16x1xf32>
    %4 = arith.divf %2, %3 : vector<16x1xf32>
    %5 = vector.broadcast %4 : vector<16x1xf32> to vector<16x512xf32>
    %6 = arith.subf %0, %5 : vector<16x512xf32>
    %7 = arith.mulf %6, %6 : vector<16x512xf32>
    %cst_2 = arith.constant dense<0.000000e+00> : vector<16xf32>
    %8 = vector.multi_reduction <add>, %7, %cst_2 [1] : vector<16x512xf32> to vector<16xf32>
    %9 = vector.shape_cast %8 : vector<16xf32> to vector<16x1xf32>
    %cst_3 = arith.constant 5.120000e+02 : f32
    %10 = vector.broadcast %cst_3 : f32 to vector<16x1xf32>
    %11 = arith.divf %9, %10 : vector<16x1xf32>
    %cst_4 = arith.constant 9.99999974E-6 : f32
    %12 = vector.broadcast %cst_4 : f32 to vector<16x1xf32>
    %13 = arith.addf %11, %12 : vector<16x1xf32>
    %14 = math.rsqrt %13 : vector<16x1xf32>
    %15 = vector.broadcast %14 : vector<16x1xf32> to vector<16x512xf32>
    %16 = arith.mulf %6, %15 : vector<16x512xf32>
    %c0_5 = arith.constant 0 : index
    %c0_6 = arith.constant 0 : index
    %17 = vector.load %arg2[%c0_5, %c0_6] : memref<1x512xf32, #tpu.memory_space<vmem>>, vector<1x512xf32>
    %18 = vector.shape_cast %17 : vector<1x512xf32> to vector<512xf32>
    %19 = vector.shape_cast %18 : vector<512xf32> to vector<1x512xf32>
    %20 = vector.broadcast %19 : vector<1x512xf32> to vector<16x512xf32>
    %21 = arith.mulf %16, %20 : vector<16x512xf32>
    %c0_7 = arith.constant 0 : index
    %c0_8 = arith.constant 0 : index
    %22 = vector.load %arg3[%c0_7, %c0_8] : memref<1x512xf32, #tpu.memory_space<vmem>>, vector<1x512xf32>
    %23 = vector.shape_cast %22 : vector<1x512xf32> to vector<512xf32>
    %24 = vector.shape_cast %23 : vector<512xf32> to vector<1x512xf32>
    %25 = vector.broadcast %24 : vector<1x512xf32> to vector<16x512xf32>
    %26 = arith.addf %21, %25 : vector<16x512xf32>
    %27 = arith.truncf %26 : vector<16x512xf32> to vector<16x512xbf16>
    %c0_9 = arith.constant 0 : index
    %c0_10 = arith.constant 0 : index
    %28 = vector.load %arg4[%c0_9, %c0_10] : memref<512x1536xbf16, #tpu.memory_space<vmem>>, vector<512x1536xbf16>
    %cst_11 = arith.constant dense<0.000000e+00> : vector<16x1536xf32>
    %29 = tpu.matmul %27, %28, %cst_11 {dimension_numbers = #tpu.dot_dimension_numbers<[1], [0], [0], [1], [0, 0, 1, 1], [], []>} : vector<16x512xbf16>, vector<512x1536xbf16>, vector<16x1536xf32> -> vector<16x1536xf32>
    %c0_12 = arith.constant 0 : index
    %c0_13 = arith.constant 0 : index
    %30 = vector.load %arg5[%c0_12, %c0_13] : memref<1x1536xf32, #tpu.memory_space<vmem>>, vector<1x1536xf32>
    %31 = vector.shape_cast %30 : vector<1x1536xf32> to vector<1536xf32>
    %32 = vector.shape_cast %31 : vector<1536xf32> to vector<1x1536xf32>
    %33 = vector.broadcast %32 : vector<1x1536xf32> to vector<16x1536xf32>
    %34 = arith.addf %29, %33 : vector<16x1536xf32>
    %35 = arith.truncf %34 : vector<16x1536xf32> to vector<16x1536xbf16>
    %c0_14 = arith.constant 0 : index
    %c0_15 = arith.constant 0 : index
    %36 = vector.load %arg6[%c0_14, %c0_15] : memref<16x1536xbf16, #tpu.memory_space<vmem>>, vector<16x1536xbf16>
    tpu.vector_store %arg6[%c0_14, %c0_15], %35 {strides = array<i32>} : memref<16x1536xbf16, #tpu.memory_space<vmem>>, vector<16x1536xbf16>,
    return
  }
  func.func @transform_0(%arg0: i32) -> (i32, i32) {
    %c0_i32 = arith.constant 0 : i32
    %c0_i32_0 = arith.constant 0 : i32
    return %arg0, %c0_i32 : i32, i32
  }
  func.func @transform_1(%arg0: i32) -> (i32, i32) {
    %c0_i32 = arith.constant 0 : i32
    %c0_i32_0 = arith.constant 0 : i32
    %c0_i32_1 = arith.constant 0 : i32
    return %c0_i32, %c0_i32_0 : i32, i32
  }
  func.func @transform_2(%arg0: i32) -> (i32, i32) {
    %c0_i32 = arith.constant 0 : i32
    %c0_i32_0 = arith.constant 0 : i32
    %c0_i32_1 = arith.constant 0 : i32
    return %c0_i32, %c0_i32_0 : i32, i32
  }
  func.func @transform_3(%arg0: i32) -> (i32, i32) {
    %c0_i32 = arith.constant 0 : i32
    %c0_i32_0 = arith.constant 0 : i32
    %c0_i32_1 = arith.constant 0 : i32
    return %c0_i32, %c0_i32_0 : i32, i32
  }
  func.func @transform_4(%arg0: i32) -> (i32, i32) {
    %c0_i32 = arith.constant 0 : i32
    %c0_i32_0 = arith.constant 0 : i32
    %c0_i32_1 = arith.constant 0 : i32
    return %c0_i32, %c0_i32_0 : i32, i32
  }
  func.func @transform_5(%arg0: i32) -> (i32, i32) {
    %c0_i32 = arith.constant 0 : i32
    %c0_i32_0 = arith.constant 0 : i32
    return %arg0, %c0_i32 : i32, i32
  }
}

</mosaic_0001>

<llo_original>
// kernel: tpu_custom_call.1
$region0: #{tpu_custom_call.1}
  #allocation0 [shape = 'u32[]', space=smem, size = 0x4, offset = 0x4, fixed_abs, tag = 'smem constant byte address 0x4 - core index']
  #allocation1 [shape = 'u32[144,128]{1,0:T(1,128)}', space=vmem, size = 0x12000, scoped, tag = 'internal scratch']
  %s0 = inlined_call_operand.hbm [shape: f32[16,512], index: 0, kind: input, shape index: {}]
  %s1 = inlined_call_operand.hbm [shape: f32[1,512], index: 1, kind: input, shape index: {}]
  %s2 = inlined_call_operand.hbm [shape: f32[1,512], index: 2, kind: input, shape index: {}]
  %s3 = inlined_call_operand.hbm [shape: bf16[512,1536], index: 3, kind: input, shape index: {}]
  %s4 = inlined_call_operand.hbm [shape: f32[1,1536], index: 4, kind: input, shape index: {}]
  %s5 = inlined_call_operand.hbm [shape: bf16[16,1536], index: 5, kind: output, shape index: {}]
  %s6 = sld [smem:[#allocation0]]
  $region50: #{tpu_custom_call.1} parent=0
    _
  %s8 = ssub.s32 1, %s6
  %s9 = scalar_select 0, %s8, %s6
  $region1: #{tpu_custom_call.1} parent=0
    #allocation2 [shape = 'u8[32768]{0}', space=vmem, size = 0x8000, scoped, tag = 'input window, operand 0, single buffered']
    #allocation3 [shape = 's32[1]{0}', space=sflag, size = 0x4, scoped, tag = 'scoped memory for tpu_custom_call.1']
    #allocation4 [shape = 's32[1]{0}', space=sflag, size = 0x4, scoped, tag = 'scoped memory for tpu_custom_call.1']
    #allocation5 [shape = 'u8[2048]{0}', space=vmem, size = 0x800, scoped, tag = 'input window, operand 1, single buffered']
    #allocation6 [shape = 's32[1]{0}', space=sflag, size = 0x4, scoped, tag = 'scoped memory for tpu_custom_call.1']
    #allocation7 [shape = 'u8[2048]{0}', space=vmem, size = 0x800, scoped, tag = 'input window, operand 2, single buffered']
    #allocation8 [shape = 'u8[1572864]{0}', space=vmem, size = 0x180000, scoped, tag = 'input window, operand 3, single buffered']
    #allocation9 [shape = 's32[1]{0}', space=sflag, size = 0x4, scoped, tag = 'scoped memory for tpu_custom_call.1']
    #allocation10 [shape = 'u8[6144]{0}', space=vmem, size = 0x1800, scoped, tag = 'input window, operand 4, single buffered']
    #allocation11 [shape = 'u8[49152]{0}', space=vmem, size = 0xc000, scoped, tag = 'output window, operand 0, single buffered']
    %10 = vsyncpa [#allocation3], 0
    %11 = vsyncpa [#allocation6], 0
    %12 = vsyncpa [#allocation9], 0
    %13 = vsyncpa [#allocation4], 0
    // Predicated region
    $region2: #{tpu_custom_call.1} parent=1 // pred_check
      _
    $region3: #{tpu_custom_call.1} parent=1 // pred_check_branch
      %15 = sbr.rel (0) target = $region5
    $region4: #{tpu_custom_call.1} parent=1 // pred_region
      %s17 = ssub.s32 1024, 1024
      %18 = vsyncadd [#allocation3], %s17
      %s19 = sshll.u32 [#allocation2], 4
      %s20 = int_to_ptr.vmem [resolvable:$true] %s19
      %25 = dma.hbm_to_vmem [thread:$0]  %s0, 1024, %s20, [#allocation3], 512, 512, 32
    $region5: #{tpu_custom_call.1} parent=1 // pred_fallthru
      _
    // Predicated region
    $region6: #{tpu_custom_call.1} parent=1 // pred_check
      _
    $region7: #{tpu_custom_call.1} parent=1 // pred_check_branch
      %27 = sbr.rel (0) target = $region9
    $region8: #{tpu_custom_call.1} parent=1 // pred_region
      %s29 = ssub.s32 64, 64
      %30 = vsyncadd [#allocation6], %s29
      %s32 = sshll.u32 [#allocation5], 4
      %s33 = int_to_ptr.vmem [resolvable:$true] %s32
      %35 = dma.hbm_to_vmem [thread:$0]  %s1, 64, %s33, [#allocation6]
    $region9: #{tpu_custom_call.1} parent=1 // pred_fallthru
      _
    // Predicated region
    $region10: #{tpu_custom_call.1} parent=1 // pred_check
      _
    $region11: #{tpu_custom_call.1} parent=1 // pred_check_branch
      %37 = sbr.rel (0) target = $region13
    $region12: #{tpu_custom_call.1} parent=1 // pred_region
      %s39 = ssub.s32 64, 64
      %40 = vsyncadd [#allocation6], %s39
      %s42 = sshll.u32 [#allocation7], 4
      %s43 = int_to_ptr.vmem [resolvable:$true] %s42
      %45 = dma.hbm_to_vmem [thread:$0]  %s2, 64, %s43, [#allocation6]
    $region13: #{tpu_custom_call.1} parent=1 // pred_fallthru
      _
    // Predicated region
    $region14: #{tpu_custom_call.1} parent=1 // pred_check
      _
    $region15: #{tpu_custom_call.1} parent=1 // pred_check_branch
      %47 = sbr.rel (0) target = $region17
    $region16: #{tpu_custom_call.1} parent=1 // pred_region
      %s49 = ssub.s32 49152, 49152
      %50 = vsyncadd [#allocation9], %s49
      %s51 = sshll.u32 [#allocation8], 4
      %s52 = int_to_ptr.vmem [resolvable:$true] %s51
      %57 = dma.hbm_to_vmem [thread:$0]  %s3, 49152, %s52, [#allocation9], 768, 768, 48
    $region17: #{tpu_custom_call.1} parent=1 // pred_fallthru
      _
    // Predicated region
    $region18: #{tpu_custom_call.1} parent=1 // pred_check
      _
    $region19: #{tpu_custom_call.1} parent=1 // pred_check_branch
      %59 = sbr.rel (0) target = $region21
    $region20: #{tpu_custom_call.1} parent=1 // pred_region
      %s61 = ssub.s32 192, 192
      %62 = vsyncadd [#allocation9], %s61
      %s64 = sshll.u32 [#allocation10], 4
      %s65 = int_to_ptr.vmem [resolvable:$true] %s64
      %67 = dma.hbm_to_vmem [thread:$0]  %s4, 192, %s65, [#allocation9]
    $region21: #{tpu_custom_call.1} parent=1 // pred_fallthru
      _
    // Predicated region
    $region22: #{tpu_custom_call.1} parent=1 // pred_check
      _
    $region23: #{tpu_custom_call.1} parent=1 // pred_check_branch
      %69 = sbr.rel (0) target = $region25
    $region24: #{tpu_custom_call.1} parent=1 // pred_region
      %70 = dma.done [#allocation3], 1024
    $region25: #{tpu_custom_call.1} parent=1 // pred_fallthru
      _
    // Predicated region
    $region26: #{tpu_custom_call.1} parent=1 // pred_check
      _
    $region27: #{tpu_custom_call.1} parent=1 // pred_check_branch
      %72 = sbr.rel (0) target = $region29
    $region28: #{tpu_custom_call.1} parent=1 // pred_region
      %73 = dma.done [#allocation6], 64
    $region29: #{tpu_custom_call.1} parent=1 // pred_fallthru
      _
    // Predicated region
    $region30: #{tpu_custom_call.1} parent=1 // pred_check
      _
    $region31: #{tpu_custom_call.1} parent=1 // pred_check_branch
      %75 = sbr.rel (0) target = $region33
    $region32: #{tpu_custom_call.1} parent=1 // pred_region
      %76 = dma.done [#allocation6], 64
    $region33: #{tpu_custom_call.1} parent=1 // pred_fallthru
      _
    // Predicated region
    $region34: #{tpu_custom_call.1} parent=1 // pred_check
      _
    $region35: #{tpu_custom_call.1} parent=1 // pred_check_branch
      %78 = sbr.rel (0) target = $region37
    $region36: #{tpu_custom_call.1} parent=1 // pred_region
      %79 = dma.done [#allocation9], 49152
    $region37: #{tpu_custom_call.1} parent=1 // pred_fallthru
      _
    // Predicated region
    $region38: #{tpu_custom_call.1} parent=1 // pred_check
      _
    $region39: #{tpu_custom_call.1} parent=1 // pred_check_branch
      %81 = sbr.rel (0) target = $region41
    $region40: #{tpu_custom_call.1} parent=1 // pred_region
      %82 = dma.done [#allocation9], 192
    $region41: #{tpu_custom_call.1} parent=1 // pred_fallthru
      _
    %v83 = vld [vmem:[#allocation2] sm:$0xff]
    %v84 = vld [vmem:[#allocation2 + $0x8] sm:$0xff]
    %v85 = vld [vmem:[#allocation2 + $0x10] sm:$0xff]
    %v86 = vld [vmem:[#allocation2 + $0x18] sm:$0xff]
    %v87 = vld [vmem:[#allocation2 + $0x20] sm:$0xff]
    %v88 = vld [vmem:[#allocation2 + $0x28] sm:$0xff]
    %v89 = vld [vmem:[#allocation2 + $0x30] sm:$0xff]
    %v90 = vld [vmem:[#allocation2 + $0x38] sm:$0xff]
    %v91 = vadd.f32 %v83, %v84
    %v92 = vadd.f32 %v91, %v85
    %v93 = vadd.f32 %v92, %v86
    %94 = vadd.xlane.f32.xlu0 %v93
    %v95 = vpop.xlane.xlu0 %94
    %v96 = vadd.f32 %v87, %v88
    %v97 = vadd.f32 %v96, %v89
    %v98 = vadd.f32 %v97, %v90
    %99 = vadd.xlane.f32.xlu0 %v98
    %v100 = vpop.xlane.xlu0 %99
    %v101 = vrcp.pop 512.0
    %v102 = vmul.f32 %v95, %v101
    %v103 = vmul.f32 %v100, %v101
    %v104 = vsub.f32 %v83, %v102
    %v105 = vsub.f32 %v84, %v102
    %v106 = vsub.f32 %v85, %v102
    %v107 = vsub.f32 %v86, %v102
    %v108 = vsub.f32 %v87, %v103
    %v109 = vsub.f32 %v88, %v103
    %v110 = vsub.f32 %v89, %v103
    %v111 = vsub.f32 %v90, %v103
    %v112 = vmul.f32 %v104, %v104
    %v113 = vmul.f32 %v105, %v105
    %v114 = vmul.f32 %v106, %v106
    %v115 = vmul.f32 %v107, %v107
    %v116 = vmul.f32 %v108, %v108
    %v117 = vmul.f32 %v109, %v109
    %v118 = vmul.f32 %v110, %v110
    %v119 = vmul.f32 %v111, %v111
    %v120 = vadd.f32 %v112, %v113
    %v121 = vadd.f32 %v120, %v114
    %v122 = vadd.f32 %v121, %v115
    %123 = vadd.xlane.f32.xlu0 %v122
    %v124 = vpop.xlane.xlu0 %123
    %v125 = vadd.f32 %v116, %v117
    %v126 = vadd.f32 %v125, %v118
    %v127 = vadd.f32 %v126, %v119
    %128 = vadd.xlane.f32.xlu0 %v127
    %v129 = vpop.xlane.xlu0 %128
    %v130 = vmul.f32 %v124, %v101
    %v131 = vmul.f32 %v129, %v101
    %v132 = vadd.f32 %v130, 1e-05
    %v133 = vadd.f32 %v131, 1e-05
    %v134 = vrsqrt.pop %v132
    %v135 = vrsqrt.pop %v133
    %v136 = vmul.f32 %v104, %v134
    %v137 = vmul.f32 %v105, %v134
    %v138 = vmul.f32 %v106, %v134
    %v139 = vmul.f32 %v107, %v134
    %v140 = vmul.f32 %v108, %v135
    %v141 = vmul.f32 %v109, %v135
    %v142 = vmul.f32 %v110, %v135
    %v143 = vmul.f32 %v111, %v135
    %v144 = vld [vmem:[#allocation5] sm:$0xf]
    %v146 = vlaneseq
    %v147 = vshrl.u32 %v146, 7
    %v148 = vsub.s32 0, %v147
    %v149 = vrot.slane %v144, %v148
    %v150 = vlaneseq
    %v151 = vshrl.u32 %v150, 7
    %v152 = vsub.s32 1, %v151
    %v153 = vrot.slane %v144, %v152
    %v154 = vlaneseq
    %v155 = vshrl.u32 %v154, 7
    %v156 = vsub.s32 2, %v155
    %v157 = vrot.slane %v144, %v156
    %v158 = vlaneseq
    %v159 = vshrl.u32 %v158, 7
    %v160 = vsub.s32 3, %v159
    %v161 = vrot.slane %v144, %v160
    %v166 = vmul.f32 %v136, %v149
    %v167 = vmul.f32 %v137, %v153
    %v168 = vmul.f32 %v138, %v157
    %v169 = vmul.f32 %v139, %v161
    %v170 = vmul.f32 %v140, %v149
    %v171 = vmul.f32 %v141, %v153
    %v172 = vmul.f32 %v142, %v157
    %v173 = vmul.f32 %v143, %v161
    %v174 = vld [vmem:[#allocation7] sm:$0xf]
    %v176 = vlaneseq
    %v177 = vshrl.u32 %v176, 7
    %v178 = vsub.s32 0, %v177
    %v179 = vrot.slane %v174, %v178
    %v180 = vlaneseq
    %v181 = vshrl.u32 %v180, 7
    %v182 = vsub.s32 1, %v181
    %v183 = vrot.slane %v174, %v182
    %v184 = vlaneseq
    %v185 = vshrl.u32 %v184, 7
    %v186 = vsub.s32 2, %v185
    %v187 = vrot.slane %v174, %v186
    %v188 = vlaneseq
    %v189 = vshrl.u32 %v188, 7
    %v190 = vsub.s32 3, %v189
    %v191 = vrot.slane %v174, %v190
    %v196 = vadd.f32 %v166, %v179
    %v197 = vadd.f32 %v167, %v183
    %v198 = vadd.f32 %v168, %v187
    %v199 = vadd.f32 %v169, %v191
    %v200 = vadd.f32 %v170, %v179
    %v201 = vadd.f32 %v171, %v183
    %v202 = vadd.f32 %v172, %v187
    %v203 = vadd.f32 %v173, %v191
    %v204 = vpack.c.bf16 %v200, %v196
    %v205 = vpack.c.bf16 %v201, %v197
    %v206 = vpack.c.bf16 %v202, %v198
    %v207 = vpack.c.bf16 %v203, %v199
    %v208 = vld [vmem:[#allocation8] sm:$0xff]
    %v209 = vld [vmem:[#allocation8 + $0x8] sm:$0xff]
    %v210 = vld [vmem:[#allocation8 + $0x10] sm:$0xff]
    %v211 = vld [vmem:[#allocation8 + $0x18] sm:$0xff]
    %v212 = vld [vmem:[#allocation8 + $0x20] sm:$0xff]
    %v213 = vld [vmem:[#allocation8 + $0x28] sm:$0xff]
    %v214 = vld [vmem:[#allocation8 + $0x30] sm:$0xff]
    %v215 = vld [vmem:[#allocation8 + $0x38] sm:$0xff]
    %v216 = vld [vmem:[#allocation8 + $0x40] sm:$0xff]
    %v217 = vld [vmem:[#allocation8 + $0x48] sm:$0xff]
    %v218 = vld [vmem:[#allocation8 + $0x50] sm:$0xff]
    %v219 = vld [vmem:[#allocation8 + $0x58] sm:$0xff]
    %v220 = vld [vmem:[#allocation8 + $0x60] sm:$0xff]
    %v221 = vld [vmem:[#allocation8 + $0x68] sm:$0xff]
    %v222 = vld [vmem:[#allocation8 + $0x70] sm:$0xff]
    %v223 = vld [vmem:[#allocation8 + $0x78] sm:$0xff]
    %v224 = vld [vmem:[#allocation8 + $0x80] sm:$0xff]
    %v225 = vld [vmem:[#allocation8 + $0x88] sm:$0xff]
    %v226 = vld [vmem:[#allocation8 + $0x90] sm:$0xff]
    %v227 = vld [vmem:[#allocation8 + $0x98] sm:$0xff]
    %v228 = vld [vmem:[#allocation8 + $0xa0] sm:$0xff]
    %v229 = vld [vmem:[#allocation8 + $0xa8] sm:$0xff]
    %v230 = vld [vmem:[#allocation8 + $0xb0] sm:$0xff]
    %v231 = vld [vmem:[#allocation8 + $0xb8] sm:$0xff]
    %v232 = vld [vmem:[#allocation8 + $0xc0] sm:$0xff]
    %v233 = vld [vmem:[#allocation8 + $0xc8] sm:$0xff]
    %v234 = vld [vmem:[#allocation8 + $0xd0] sm:$0xff]
    %v235 = vld [vmem:[#allocation8 + $0xd8] sm:$0xff]
    %v236 = vld [vmem:[#allocation8 + $0xe0] sm:$0xff]
    %v237 = vld [vmem:[#allocation8 + $0xe8] sm:$0xff]
    %v238 = vld [vmem:[#allocation8 + $0xf0] sm:$0xff]
    %v239 = vld [vmem:[#allocation8 + $0xf8] sm:$0xff]
    %v240 = vld [vmem:[#allocation8 + $0x100] sm:$0xff]
    %v241 = vld [vmem:[#allocation8 + $0x108] sm:$0xff]
    %v242 = vld [vmem:[#allocation8 + $0x110] sm:$0xff]
    %v243 = vld [vmem:[#allocation8 + $0x118] sm:$0xff]
    %v244 = vld [vmem:[#allocation8 + $0x120] sm:$0xff]
    %v245 = vld [vmem:[#allocation8 + $0x128] sm:$0xff]
    %v246 = vld [vmem:[#allocation8 + $0x130] sm:$0xff]
    %v247 = vld [vmem:[#allocation8 + $0x138] sm:$0xff]
    %v248 = vld [vmem:[#allocation8 + $0x140] sm:$0xff]
    %v249 = vld [vmem:[#allocation8 + $0x148] sm:$0xff]
    %v250 = vld [vmem:[#allocation8 + $0x150] sm:$0xff]
    %v251 = vld [vmem:[#allocation8 + $0x158] sm:$0xff]
    %v252 = vld [vmem:[#allocation8 + $0x160] sm:$0xff]
    %v253 = vld [vmem:[#allocation8 + $0x168] sm:$0xff]
    %v254 = vld [vmem:[#allocation8 + $0x170] sm:$0xff]
    %v255 = vld [vmem:[#allocation8 + $0x178] sm:$0xff]
    %v256 = vld [vmem:[#allocation8 + $0x180] sm:$0xff]
    %v257 = vld [vmem:[#allocation8 + $0x188] sm:$0xff]
    %v258 = vld [vmem:[#allocation8 + $0x190] sm:$0xff]
    %v259 = vld [vmem:[#allocation8 + $0x198] sm:$0xff]
    %v260 = vld [vmem:[#allocation8 + $0x1a0] sm:$0xff]
    %v261 = vld [vmem:[#allocation8 + $0x1a8] sm:$0xff]
    %v262 = vld [vmem:[#allocation8 + $0x1b0] sm:$0xff]
    %v263 = vld [vmem:[#allocation8 + $0x1b8] sm:$0xff]
    %v264 = vld [vmem:[#allocation8 + $0x1c0] sm:$0xff]
    %v265 = vld [vmem:[#allocation8 + $0x1c8] sm:$0xff]
    %v266 = vld [vmem:[#allocation8 + $0x1d0] sm:$0xff]
    %v267 = vld [vmem:[#allocation8 + $0x1d8] sm:$0xff]
    %v268 = vld [vmem:[#allocation8 + $0x1e0] sm:$0xff]
    %v269 = vld [vmem:[#allocation8 + $0x1e8] sm:$0xff]
    %v270 = vld [vmem:[#allocation8 + $0x1f0] sm:$0xff]
    %v271 = vld [vmem:[#allocation8 + $0x1f8] sm:$0xff]
    %v272 = vld [vmem:[#allocation8 + $0x200] sm:$0xff]
    %v273 = vld [vmem:[#allocation8 + $0x208] sm:$0xff]
    %v274 = vld [vmem:[#allocation8 + $0x210] sm:$0xff]
    %v275 = vld [vmem:[#allocation8 + $0x218] sm:$0xff]
    %v276 = vld [vmem:[#allocation8 + $0x220] sm:$0xff]
    %v277 = vld [vmem:[#allocation8 + $0x228] sm:$0xff]
    %v278 = vld [vmem:[#allocation8 + $0x230] sm:$0xff]
    %v279 = vld [vmem:[#allocation8 + $0x238] sm:$0xff]
    %v280 = vld [vmem:[#allocation8 + $0x240] sm:$0xff]
    %v281 = vld [vmem:[#allocation8 + $0x248] sm:$0xff]
    %v282 = vld [vmem:[#allocation8 + $0x250] sm:$0xff]
    %v283 = vld [vmem:[#allocation8 + $0x258] sm:$0xff]
    %v284 = vld [vmem:[#allocation8 + $0x260] sm:$0xff]
    %v285 = vld [vmem:[#allocation8 + $0x268] sm:$0xff]
    %v286 = vld [vmem:[#allocation8 + $0x270] sm:$0xff]
    %v287 = vld [vmem:[#allocation8 + $0x278] sm:$0xff]
    %v288 = vld [vmem:[#allocation8 + $0x280] sm:$0xff]
    %v289 = vld [vmem:[#allocation8 + $0x288] sm:$0xff]
    %v290 = vld [vmem:[#allocation8 + $0x290] sm:$0xff]
    %v291 = vld [vmem:[#allocation8 + $0x298] sm:$0xff]
    %v292 = vld [vmem:[#allocation8 + $0x2a0] sm:$0xff]
    %v293 = vld [vmem:[#allocation8 + $0x2a8] sm:$0xff]
    %v294 = vld [vmem:[#allocation8 + $0x2b0] sm:$0xff]
    %v295 = vld [vmem:[#allocation8 + $0x2b8] sm:$0xff]
    %v296 = vld [vmem:[#allocation8 + $0x2c0] sm:$0xff]
    %v297 = vld [vmem:[#allocation8 + $0x2c8] sm:$0xff]
    %v298 = vld [vmem:[#allocation8 + $0x2d0] sm:$0xff]
    %v299 = vld [vmem:[#allocation8 + $0x2d8] sm:$0xff]
    %v300 = vld [vmem:[#allocation8 + $0x2e0] sm:$0xff]
    %v301 = vld [vmem:[#allocation8 + $0x2e8] sm:$0xff]
    %v302 = vld [vmem:[#allocation8 + $0x2f0] sm:$0xff]
    %v303 = vld [vmem:[#allocation8 + $0x2f8] sm:$0xff]
    %v304 = vld [vmem:[#allocation8 + $0x300] sm:$0xff]
    %v305 = vld [vmem:[#allocation8 + $0x308] sm:$0xff]
    %v306 = vld [vmem:[#allocation8 + $0x310] sm:$0xff]
    %v307 = vld [vmem:[#allocation8 + $0x318] sm:$0xff]
    %v308 = vld [vmem:[#allocation8 + $0x320] sm:$0xff]
    %v309 = vld [vmem:[#allocation8 + $0x328] sm:$0xff]
    %v310 = vld [vmem:[#allocation8 + $0x330] sm:$0xff]
    %v311 = vld [vmem:[#allocation8 + $0x338] sm:$0xff]
    %v312 = vld [vmem:[#allocation8 + $0x340] sm:$0xff]
    %v313 = vld [vmem:[#allocation8 + $0x348] sm:$0xff]
    %v314 = vld [vmem:[#allocation8 + $0x350] sm:$0xff]
    %v315 = vld [vmem:[#allocation8 + $0x358] sm:$0xff]
    %v316 = vld [vmem:[#allocation8 + $0x360] sm:$0xff]
    %v317 = vld [vmem:[#allocation8 + $0x368] sm:$0xff]
    %v318 = vld [vmem:[#allocation8 + $0x370] sm:$0xff]
    %v319 = vld [vmem:[#allocation8 + $0x378] sm:$0xff]
    %v320 = vld [vmem:[#allocation8 + $0x380] sm:$0xff]
    %v321 = vld [vmem:[#allocation8 + $0x388] sm:$0xff]
    %v322 = vld [vmem:[#allocation8 + $0x390] sm:$0xff]
    %v323 = vld [vmem:[#allocation8 + $0x398] sm:$0xff]
    %v324 = vld [vmem:[#allocation8 + $0x3a0] sm:$0xff]
    %v325 = vld [vmem:[#allocation8 + $0x3a8] sm:$0xff]
    %v326 = vld [vmem:[#allocation8 + $0x3b0] sm:$0xff]
    %v327 = vld [vmem:[#allocation8 + $0x3b8] sm:$0xff]
    %v328 = vld [vmem:[#allocation8 + $0x3c0] sm:$0xff]
    %v329 = vld [vmem:[#allocation8 + $0x3c8] sm:$0xff]
    %v330 = vld [vmem:[#allocation8 + $0x3d0] sm:$0xff]
    %v331 = vld [vmem:[#allocation8 + $0x3d8] sm:$0xff]
    %v332 = vld [vmem:[#allocation8 + $0x3e0] sm:$0xff]
    %v333 = vld [vmem:[#allocation8 + $0x3e8] sm:$0xff]
    %v334 = vld [vmem:[#allocation8 + $0x3f0] sm:$0xff]
    %v335 = vld [vmem:[#allocation8 + $0x3f8] sm:$0xff]
    %v336 = vld [vmem:[#allocation8 + $0x400] sm:$0xff]
    %v337 = vld [vmem:[#allocation8 + $0x408] sm:$0xff]
    %v338 = vld [vmem:[#allocation8 + $0x410] sm:$0xff]
    %v339 = vld [vmem:[#allocation8 + $0x418] sm:$0xff]
    %v340 = vld [vmem:[#allocation8 + $0x420] sm:$0xff]
    %v341 = vld [vmem:[#allocation8 + $0x428] sm:$0xff]
    %v342 = vld [vmem:[#allocation8 + $0x430] sm:$0xff]
    %v343 = vld [vmem:[#allocation8 + $0x438] sm:$0xff]
    %v344 = vld [vmem:[#allocation8 + $0x440] sm:$0xff]
    %v345 = vld [vmem:[#allocation8 + $0x448] sm:$0xff]
    %v346 = vld [vmem:[#allocation8 + $0x450] sm:$0xff]
    %v347 = vld [vmem:[#allocation8 + $0x458] sm:$0xff]
    %v348 = vld [vmem:[#allocation8 + $0x460] sm:$0xff]
    %v349 = vld [vmem:[#allocation8 + $0x468] sm:$0xff]
    %v350 = vld [vmem:[#allocation8 + $0x470] sm:$0xff]
    %v351 = vld [vmem:[#allocation8 + $0x478] sm:$0xff]
    %v352 = vld [vmem:[#allocation8 + $0x480] sm:$0xff]
    %v353 = vld [vmem:[#allocation8 + $0x488] sm:$0xff]
    %v354 = vld [vmem:[#allocation8 + $0x490] sm:$0xff]
    %v355 = vld [vmem:[#allocation8 + $0x498] sm:$0xff]
    %v356 = vld [vmem:[#allocation8 + $0x4a0] sm:$0xff]
    %v357 = vld [vmem:[#allocation8 + $0x4a8] sm:$0xff]
    %v358 = vld [vmem:[#allocation8 + $0x4b0] sm:$0xff]
    %v359 = vld [vmem:[#allocation8 + $0x4b8] sm:$0xff]
    %v360 = vld [vmem:[#allocation8 + $0x4c0] sm:$0xff]
    %v361 = vld [vmem:[#allocation8 + $0x4c8] sm:$0xff]
    %v362 = vld [vmem:[#allocation8 + $0x4d0] sm:$0xff]
    %v363 = vld [vmem:[#allocation8 + $0x4d8] sm:$0xff]
    %v364 = vld [vmem:[#allocation8 + $0x4e0] sm:$0xff]
    %v365 = vld [vmem:[#allocation8 + $0x4e8] sm:$0xff]
    %v366 = vld [vmem:[#allocation8 + $0x4f0] sm:$0xff]
    %v367 = vld [vmem:[#allocation8 + $0x4f8] sm:$0xff]
    %v368 = vld [vmem:[#allocation8 + $0x500] sm:$0xff]
    %v369 = vld [vmem:[#allocation8 + $0x508] sm:$0xff]
    %v370 = vld [vmem:[#allocation8 + $0x510] sm:$0xff]
    %v371 = vld [vmem:[#allocation8 + $0x518] sm:$0xff]
    %v372 = vld [vmem:[#allocation8 + $0x520] sm:$0xff]
    %v373 = vld [vmem:[#allocation8 + $0x528] sm:$0xff]
    %v374 = vld [vmem:[#allocation8 + $0x530] sm:$0xff]
    %v375 = vld [vmem:[#allocation8 + $0x538] sm:$0xff]
    %v376 = vld [vmem:[#allocation8 + $0x540] sm:$0xff]
    %v377 = vld [vmem:[#allocation8 + $0x548] sm:$0xff]
    %v378 = vld [vmem:[#allocation8 + $0x550] sm:$0xff]
    %v379 = vld [vmem:[#allocation8 + $0x558] sm:$0xff]
    %v380 = vld [vmem:[#allocation8 + $0x560] sm:$0xff]
    %v381 = vld [vmem:[#allocation8 + $0x568] sm:$0xff]
    %v382 = vld [vmem:[#allocation8 + $0x570] sm:$0xff]
    %v383 = vld [vmem:[#allocation8 + $0x578] sm:$0xff]
    %v384 = vld [vmem:[#allocation8 + $0x580] sm:$0xff]
    %v385 = vld [vmem:[#allocation8 + $0x588] sm:$0xff]
    %v386 = vld [vmem:[#allocation8 + $0x590] sm:$0xff]
    %v387 = vld [vmem:[#allocation8 + $0x598] sm:$0xff]
    %v388 = vld [vmem:[#allocation8 + $0x5a0] sm:$0xff]
    %v389 = vld [vmem:[#allocation8 + $0x5a8] sm:$0xff]
    %v390 = vld [vmem:[#allocation8 + $0x5b0] sm:$0xff]
    %v391 = vld [vmem:[#allocation8 + $0x5b8] sm:$0xff]
    %v392 = vld [vmem:[#allocation8 + $0x5c0] sm:$0xff]
    %v393 = vld [vmem:[#allocation8 + $0x5c8] sm:$0xff]
    %v394 = vld [vmem:[#allocation8 + $0x5d0] sm:$0xff]
    %v395 = vld [vmem:[#allocation8 + $0x5d8] sm:$0xff]
    %v396 = vld [vmem:[#allocation8 + $0x5e0] sm:$0xff]
    %v397 = vld [vmem:[#allocation8 + $0x5e8] sm:$0xff]
    %v398 = vld [vmem:[#allocation8 + $0x5f0] sm:$0xff]
    %v399 = vld [vmem:[#allocation8 + $0x5f8] sm:$0xff]
    %v400 = vld [vmem:[#allocation8 + $0x600] sm:$0xff]
    %v401 = vld [vmem:[#allocation8 + $0x608] sm:$0xff]
    %v402 = vld [vmem:[#allocation8 + $0x610] sm:$0xff]
    %v403 = vld [vmem:[#allocation8 + $0x618] sm:$0xff]
    %v404 = vld [vmem:[#allocation8 + $0x620] sm:$0xff]
    %v405 = vld [vmem:[#allocation8 + $0x628] sm:$0xff]
    %v406 = vld [vmem:[#allocation8 + $0x630] sm:$0xff]
    %v407 = vld [vmem:[#allocation8 + $0x638] sm:$0xff]
    %v408 = vld [vmem:[#allocation8 + $0x640] sm:$0xff]
    %v409 = vld [vmem:[#allocation8 + $0x648] sm:$0xff]
    %v410 = vld [vmem:[#allocation8 + $0x650] sm:$0xff]
    %v411 = vld [vmem:[#allocation8 + $0x658] sm:$0xff]
    %v412 = vld [vmem:[#allocation8 + $0x660] sm:$0xff]
    %v413 = vld [vmem:[#allocation8 + $0x668] sm:$0xff]
    %v414 = vld [vmem:[#allocation8 + $0x670] sm:$0xff]
    %v415 = vld [vmem:[#allocation8 + $0x678] sm:$0xff]
    %v416 = vld [vmem:[#allocation8 + $0x680] sm:$0xff]
    %v417 = vld [vmem:[#allocation8 + $0x688] sm:$0xff]
    %v418 = vld [vmem:[#allocation8 + $0x690] sm:$0xff]
    %v419 = vld [vmem:[#allocation8 + $0x698] sm:$0xff]
    %v420 = vld [vmem:[#allocation8 + $0x6a0] sm:$0xff]
    %v421 = vld [vmem:[#allocation8 + $0x6a8] sm:$0xff]
    %v422 = vld [vmem:[#allocation8 + $0x6b0] sm:$0xff]
    %v423 = vld [vmem:[#allocation8 + $0x6b8] sm:$0xff]
    %v424 = vld [vmem:[#allocation8 + $0x6c0] sm:$0xff]
    %v425 = vld [vmem:[#allocation8 + $0x6c8] sm:$0xff]
    %v426 = vld [vmem:[#allocation8 + $0x6d0] sm:$0xff]
    %v427 = vld [vmem:[#allocation8 + $0x6d8] sm:$0xff]
    %v428 = vld [vmem:[#allocation8 + $0x6e0] sm:$0xff]
    %v429 = vld [vmem:[#allocation8 + $0x6e8] sm:$0xff]
    %v430 = vld [vmem:[#allocation8 + $0x6f0] sm:$0xff]
    %v431 = vld [vmem:[#allocation8 + $0x6f8] sm:$0xff]
    %v432 = vld [vmem:[#allocation8 + $0x700] sm:$0xff]
    %v433 = vld [vmem:[#allocation8 + $0x708] sm:$0xff]
    %v434 = vld [vmem:[#allocation8 + $0x710] sm:$0xff]
    %v435 = vld [vmem:[#allocation8 + $0x718] sm:$0xff]
    %v436 = vld [vmem:[#allocation8 + $0x720] sm:$0xff]
    %v437 = vld [vmem:[#allocation8 + $0x728] sm:$0xff]
    %v438 = vld [vmem:[#allocation8 + $0x730] sm:$0xff]
    %v439 = vld [vmem:[#allocation8 + $0x738] sm:$0xff]
    %v440 = vld [vmem:[#allocation8 + $0x740] sm:$0xff]
    %v441 = vld [vmem:[#allocation8 + $0x748] sm:$0xff]
    %v442 = vld [vmem:[#allocation8 + $0x750] sm:$0xff]
    %v443 = vld [vmem:[#allocation8 + $0x758] sm:$0xff]
    %v444 = vld [vmem:[#allocation8 + $0x760] sm:$0xff]
    %v445 = vld [vmem:[#allocation8 + $0x768] sm:$0xff]
    %v446 = vld [vmem:[#allocation8 + $0x770] sm:$0xff]
    %v447 = vld [vmem:[#allocation8 + $0x778] sm:$0xff]
    %v448 = vld [vmem:[#allocation8 + $0x780] sm:$0xff]
    %v449 = vld [vmem:[#allocation8 + $0x788] sm:$0xff]
    %v450 = vld [vmem:[#allocation8 + $0x790] sm:$0xff]
    %v451 = vld [vmem:[#allocation8 + $0x798] sm:$0xff]
    %v452 = vld [vmem:[#allocation8 + $0x7a0] sm:$0xff]
    %v453 = vld [vmem:[#allocation8 + $0x7a8] sm:$0xff]
    %v454 = vld [vmem:[#allocation8 + $0x7b0] sm:$0xff]
    %v455 = vld [vmem:[#allocation8 + $0x7b8] sm:$0xff]
    %v456 = vld [vmem:[#allocation8 + $0x7c0] sm:$0xff]
    %v457 = vld [vmem:[#allocation8 + $0x7c8] sm:$0xff]
    %v458 = vld [vmem:[#allocation8 + $0x7d0] sm:$0xff]
    %v459 = vld [vmem:[#allocation8 + $0x7d8] sm:$0xff]
    %v460 = vld [vmem:[#allocation8 + $0x7e0] sm:$0xff]
    %v461 = vld [vmem:[#allocation8 + $0x7e8] sm:$0xff]
    %v462 = vld [vmem:[#allocation8 + $0x7f0] sm:$0xff]
    %v463 = vld [vmem:[#allocation8 + $0x7f8] sm:$0xff]
    %v464 = vld [vmem:[#allocation8 + $0x800] sm:$0xff]
    %v465 = vld [vmem:[#allocation8 + $0x808] sm:$0xff]
    %v466 = vld [vmem:[#allocation8 + $0x810] sm:$0xff]
    %v467 = vld [vmem:[#allocation8 + $0x818] sm:$0xff]
    %v468 = vld [vmem:[#allocation8 + $0x820] sm:$0xff]
    %v469 = vld [vmem:[#allocation8 + $0x828] sm:$0xff]
    %v470 = vld [vmem:[#allocation8 + $0x830] sm:$0xff]
    %v471 = vld [vmem:[#allocation8 + $0x838] sm:$0xff]
    %v472 = vld [vmem:[#allocation8 + $0x840] sm:$0xff]
    %v473 = vld [vmem:[#allocation8 + $0x848] sm:$0xff]
    %v474 = vld [vmem:[#allocation8 + $0x850] sm:$0xff]
    %v475 = vld [vmem:[#allocation8 + $0x858] sm:$0xff]
    %v476 = vld [vmem:[#allocation8 + $0x860] sm:$0xff]
    %v477 = vld [vmem:[#allocation8 + $0x868] sm:$0xff]
    %v478 = vld [vmem:[#allocation8 + $0x870] sm:$0xff]
    %v479 = vld [vmem:[#allocation8 + $0x878] sm:$0xff]
    %v480 = vld [vmem:[#allocation8 + $0x880] sm:$0xff]
    %v481 = vld [vmem:[#allocation8 + $0x888] sm:$0xff]
    %v482 = vld [vmem:[#allocation8 + $0x890] sm:$0xff]
    %v483 = vld [vmem:[#allocation8 + $0x898] sm:$0xff]
    %v484 = vld [vmem:[#allocation8 + $0x8a0] sm:$0xff]
    %v485 = vld [vmem:[#allocation8 + $0x8a8] sm:$0xff]
    %v486 = vld [vmem:[#allocation8 + $0x8b0] sm:$0xff]
    %v487 = vld [vmem:[#allocation8 + $0x8b8] sm:$0xff]
    %v488 = vld [vmem:[#allocation8 + $0x8c0] sm:$0xff]
    %v489 = vld [vmem:[#allocation8 + $0x8c8] sm:$0xff]
    %v490 = vld [vmem:[#allocation8 + $0x8d0] sm:$0xff]
    %v491 = vld [vmem:[#allocation8 + $0x8d8] sm:$0xff]
    %v492 = vld [vmem:[#allocation8 + $0x8e0] sm:$0xff]
    %v493 = vld [vmem:[#allocation8 + $0x8e8] sm:$0xff]
    %v494 = vld [vmem:[#allocation8 + $0x8f0] sm:$0xff]
    %v495 = vld [vmem:[#allocation8 + $0x8f8] sm:$0xff]
    %v496 = vld [vmem:[#allocation8 + $0x900] sm:$0xff]
    %v497 = vld [vmem:[#allocation8 + $0x908] sm:$0xff]
    %v498 = vld [vmem:[#allocation8 + $0x910] sm:$0xff]
    %v499 = vld [vmem:[#allocation8 + $0x918] sm:$0xff]
    %v500 = vld [vmem:[#allocation8 + $0x920] sm:$0xff]
    %v501 = vld [vmem:[#allocation8 + $0x928] sm:$0xff]
    %v502 = vld [vmem:[#allocation8 + $0x930] sm:$0xff]
    %v503 = vld [vmem:[#allocation8 + $0x938] sm:$0xff]
    %v504 = vld [vmem:[#allocation8 + $0x940] sm:$0xff]
    %v505 = vld [vmem:[#allocation8 + $0x948] sm:$0xff]
    %v506 = vld [vmem:[#allocation8 + $0x950] sm:$0xff]
    %v507 = vld [vmem:[#allocation8 + $0x958] sm:$0xff]
    %v508 = vld [vmem:[#allocation8 + $0x960] sm:$0xff]
    %v509 = vld [vmem:[#allocation8 + $0x968] sm:$0xff]
    %v510 = vld [vmem:[#allocation8 + $0x970] sm:$0xff]
    %v511 = vld [vmem:[#allocation8 + $0x978] sm:$0xff]
    %v512 = vld [vmem:[#allocation8 + $0x980] sm:$0xff]
    %v513 = vld [vmem:[#allocation8 + $0x988] sm:$0xff]
    %v514 = vld [vmem:[#allocation8 + $0x990] sm:$0xff]
    %v515 = vld [vmem:[#allocation8 + $0x998] sm:$0xff]
    %v516 = vld [vmem:[#allocation8 + $0x9a0] sm:$0xff]
    %v517 = vld [vmem:[#allocation8 + $0x9a8] sm:$0xff]
    %v518 = vld [vmem:[#allocation8 + $0x9b0] sm:$0xff]
    %v519 = vld [vmem:[#allocation8 + $0x9b8] sm:$0xff]
    %v520 = vld [vmem:[#allocation8 + $0x9c0] sm:$0xff]
    %v521 = vld [vmem:[#allocation8 + $0x9c8] sm:$0xff]
    %v522 = vld [vmem:[#allocation8 + $0x9d0] sm:$0xff]
    %v523 = vld [vmem:[#allocation8 + $0x9d8] sm:$0xff]
    %v524 = vld [vmem:[#allocation8 + $0x9e0] sm:$0xff]
    %v525 = vld [vmem:[#allocation8 + $0x9e8] sm:$0xff]
    %v526 = vld [vmem:[#allocation8 + $0x9f0] sm:$0xff]
    %v527 = vld [vmem:[#allocation8 + $0x9f8] sm:$0xff]
    %v528 = vld [vmem:[#allocation8 + $0xa00] sm:$0xff]
    %v529 = vld [vmem:[#allocation8 + $0xa08] sm:$0xff]
    %v530 = vld [vmem:[#allocation8 + $0xa10] sm:$0xff]
    %v531 = vld [vmem:[#allocation8 + $0xa18] sm:$0xff]
    %v532 = vld [vmem:[#allocation8 + $0xa20] sm:$0xff]
    %v533 = vld [vmem:[#allocation8 + $0xa28] sm:$0xff]
    %v534 = vld [vmem:[#allocation8 + $0xa30] sm:$0xff]
    %v535 = vld [vmem:[#allocation8 + $0xa38] sm:$0xff]
    %v536 = vld [vmem:[#allocation8 + $0xa40] sm:$0xff]
    %v537 = vld [vmem:[#allocation8 + $0xa48] sm:$0xff]
    %v538 = vld [vmem:[#allocation8 + $0xa50] sm:$0xff]
    %v539 = vld [vmem:[#allocation8 + $0xa58] sm:$0xff]
    %v540 = vld [vmem:[#allocation8 + $0xa60] sm:$0xff]
    %v541 = vld [vmem:[#allocation8 + $0xa68] sm:$0xff]
    %v542 = vld [vmem:[#allocation8 + $0xa70] sm:$0xff]
    %v543 = vld [vmem:[#allocation8 + $0xa78] sm:$0xff]
    %v544 = vld [vmem:[#allocation8 + $0xa80] sm:$0xff]
    %v545 = vld [vmem:[#allocation8 + $0xa88] sm:$0xff]
    %v546 = vld [vmem:[#allocation8 + $0xa90] sm:$0xff]
    %v547 = vld [vmem:[#allocation8 + $0xa98] sm:$0xff]
    %v548 = vld [vmem:[#allocation8 + $0xaa0] sm:$0xff]
    %v549 = vld [vmem:[#allocation8 + $0xaa8] sm:$0xff]
    %v550 = vld [vmem:[#allocation8 + $0xab0] sm:$0xff]
    %v551 = vld [vmem:[#allocation8 + $0xab8] sm:$0xff]
    %v552 = vld [vmem:[#allocation8 + $0xac0] sm:$0xff]
    %v553 = vld [vmem:[#allocation8 + $0xac8] sm:$0xff]
    %v554 = vld [vmem:[#allocation8 + $0xad0] sm:$0xff]
    %v555 = vld [vmem:[#allocation8 + $0xad8] sm:$0xff]
    %v556 = vld [vmem:[#allocation8 + $0xae0] sm:$0xff]
    %v557 = vld [vmem:[#allocation8 + $0xae8] sm:$0xff]
    %v558 = vld [vmem:[#allocation8 + $0xaf0] sm:$0xff]
    %v559 = vld [vmem:[#allocation8 + $0xaf8] sm:$0xff]
    %v560 = vld [vmem:[#allocation8 + $0xb00] sm:$0xff]
    %v561 = vld [vmem:[#allocation8 + $0xb08] sm:$0xff]
    %v562 = vld [vmem:[#allocation8 + $0xb10] sm:$0xff]
    %v563 = vld [vmem:[#allocation8 + $0xb18] sm:$0xff]
    %v564 = vld [vmem:[#allocation8 + $0xb20] sm:$0xff]
    %v565 = vld [vmem:[#allocation8 + $0xb28] sm:$0xff]
    %v566 = vld [vmem:[#allocation8 + $0xb30] sm:$0xff]
    %v567 = vld [vmem:[#allocation8 + $0xb38] sm:$0xff]
    %v568 = vld [vmem:[#allocation8 + $0xb40] sm:$0xff]
    %v569 = vld [vmem:[#allocation8 + $0xb48] sm:$0xff]
    %v570 = vld [vmem:[#allocation8 + $0xb50] sm:$0xff]
    %v571 = vld [vmem:[#allocation8 + $0xb58] sm:$0xff]
    %v572 = vld [vmem:[#allocation8 + $0xb60] sm:$0xff]
    %v573 = vld [vmem:[#allocation8 + $0xb68] sm:$0xff]
    %v574 = vld [vmem:[#allocation8 + $0xb70] sm:$0xff]
    %v575 = vld [vmem:[#allocation8 + $0xb78] sm:$0xff]
    %v576 = vld [vmem:[#allocation8 + $0xb80] sm:$0xff]
    %v577 = vld [vmem:[#allocation8 + $0xb88] sm:$0xff]
    %v578 = vld [vmem:[#allocation8 + $0xb90] sm:$0xff]
    %v579 = vld [vmem:[#allocation8 + $0xb98] sm:$0xff]
    %v580 = vld [vmem:[#allocation8 + $0xba0] sm:$0xff]
    %v581 = vld [vmem:[#allocation8 + $0xba8] sm:$0xff]
    %v582 = vld [vmem:[#allocation8 + $0xbb0] sm:$0xff]
    %v583 = vld [vmem:[#allocation8 + $0xbb8] sm:$0xff]
    %v584 = vld [vmem:[#allocation8 + $0xbc0] sm:$0xff]
    %v585 = vld [vmem:[#allocation8 + $0xbc8] sm:$0xff]
    %v586 = vld [vmem:[#allocation8 + $0xbd0] sm:$0xff]
    %v587 = vld [vmem:[#allocation8 + $0xbd8] sm:$0xff]
    %v588 = vld [vmem:[#allocation8 + $0xbe0] sm:$0xff]
    %v589 = vld [vmem:[#allocation8 + $0xbe8] sm:$0xff]
    %v590 = vld [vmem:[#allocation8 + $0xbf0] sm:$0xff]
    %v591 = vld [vmem:[#allocation8 + $0xbf8] sm:$0xff]
    %v592 = vld [vmem:[#allocation10] sm:$0xff]
    %v593 = vld [vmem:[#allocation10 + $0x8] sm:$0xf]
    %v596 = vlaneseq
    %v597 = vshrl.u32 %v596, 7
    %v598 = vsub.s32 0, %v597
    %v599 = vrot.slane %v592, %v598
    %v600 = vlaneseq
    %v601 = vshrl.u32 %v600, 7
    %v602 = vsub.s32 1, %v601
    %v603 = vrot.slane %v592, %v602
    %v604 = vlaneseq
    %v605 = vshrl.u32 %v604, 7
    %v606 = vsub.s32 2, %v605
    %v607 = vrot.slane %v592, %v606
    %v608 = vlaneseq
    %v609 = vshrl.u32 %v608, 7
    %v610 = vsub.s32 3, %v609
    %v611 = vrot.slane %v592, %v610
    %v612 = vlaneseq
    %v613 = vshrl.u32 %v612, 7
    %v614 = vsub.s32 4, %v613
    %v615 = vrot.slane %v592, %v614
    %v616 = vlaneseq
    %v617 = vshrl.u32 %v616, 7
    %v618 = vsub.s32 5, %v617
    %v619 = vrot.slane %v592, %v618
    %v620 = vlaneseq
    %v621 = vshrl.u32 %v620, 7
    %v622 = vsub.s32 6, %v621
    %v623 = vrot.slane %v592, %v622
    %v624 = vlaneseq
    %v625 = vshrl.u32 %v624, 7
    %v626 = vsub.s32 7, %v625
    %v627 = vrot.slane %v592, %v626
    %v628 = vlaneseq
    %v629 = vshrl.u32 %v628, 7
    %v630 = vsub.s32 0, %v629
    %v631 = vrot.slane %v593, %v630
    %v632 = vlaneseq
    %v633 = vshrl.u32 %v632, 7
    %v634 = vsub.s32 1, %v633
    %v635 = vrot.slane %v593, %v634
    %v636 = vlaneseq
    %v637 = vshrl.u32 %v636, 7
    %v638 = vsub.s32 2, %v637
    %v639 = vrot.slane %v593, %v638
    %v640 = vlaneseq
    %v641 = vshrl.u32 %v640, 7
    %v642 = vsub.s32 3, %v641
    %v643 = vrot.slane %v593, %v642
    %v1040 = vunpack.c.l.b16 %v208
    %v1041 = vunpack.c.h.b16 %v208
    %v1042 = vunpack.c.l.b16 %v209
    %v1043 = vunpack.c.h.b16 %v209
    %v1044 = vunpack.c.l.b16 %v210
    %v1045 = vunpack.c.h.b16 %v210
    %v1046 = vunpack.c.l.b16 %v211
    %v1047 = vunpack.c.h.b16 %v211
    %v1048 = vunpack.c.l.b16 %v212
    %v1049 = vunpack.c.h.b16 %v212
    %v1050 = vunpack.c.l.b16 %v213
    %v1051 = vunpack.c.h.b16 %v213
    %v1052 = vunpack.c.l.b16 %v214
    %v1053 = vunpack.c.h.b16 %v214
    %v1054 = vunpack.c.l.b16 %v215
    %v1055 = vunpack.c.h.b16 %v215
    %v1056 = vunpack.c.l.b16 %v216
    %v1057 = vunpack.c.h.b16 %v216
    %v1058 = vunpack.c.l.b16 %v217
    %v1059 = vunpack.c.h.b16 %v217
    %v1060 = vunpack.c.l.b16 %v218
    %v1061 = vunpack.c.h.b16 %v218
    %v1062 = vunpack.c.l.b16 %v219
    %v1063 = vunpack.c.h.b16 %v219
    %v1064 = vunpack.c.l.b16 %v220
    %v1065 = vunpack.c.h.b16 %v220
    %v1066 = vunpack.c.l.b16 %v221
    %v1067 = vunpack.c.h.b16 %v221
    %v1068 = vunpack.c.l.b16 %v222
    %v1069 = vunpack.c.h.b16 %v222
    %v1070 = vunpack.c.l.b16 %v223
    %v1071 = vunpack.c.h.b16 %v223
    %v1072 = vunpack.c.l.b16 %v224
    %v1073 = vunpack.c.h.b16 %v224
    %v1074 = vunpack.c.l.b16 %v225
    %v1075 = vunpack.c.h.b16 %v225
    %v1076 = vunpack.c.l.b16 %v226
    %v1077 = vunpack.c.h.b16 %v226
    %v1078 = vunpack.c.l.b16 %v227
    %v1079 = vunpack.c.h.b16 %v227
    %v1080 = vunpack.c.l.b16 %v228
    %v1081 = vunpack.c.h.b16 %v228
    %v1082 = vunpack.c.l.b16 %v229
    %v1083 = vunpack.c.h.b16 %v229
    %v1084 = vunpack.c.l.b16 %v230
    %v1085 = vunpack.c.h.b16 %v230
    %v1086 = vunpack.c.l.b16 %v231
    %v1087 = vunpack.c.h.b16 %v231
    %v1088 = vunpack.c.l.b16 %v232
    %v1089 = vunpack.c.h.b16 %v232
    %v1090 = vunpack.c.l.b16 %v233
    %v1091 = vunpack.c.h.b16 %v233
    %v1092 = vunpack.c.l.b16 %v234
    %v1093 = vunpack.c.h.b16 %v234
    %v1094 = vunpack.c.l.b16 %v235
    %v1095 = vunpack.c.h.b16 %v235
    %v1096 = vunpack.c.l.b16 %v236
    %v1097 = vunpack.c.h.b16 %v236
    %v1098 = vunpack.c.l.b16 %v237
    %v1099 = vunpack.c.h.b16 %v237
    %v1100 = vunpack.c.l.b16 %v238
    %v1101 = vunpack.c.h.b16 %v238
    %v1102 = vunpack.c.l.b16 %v239
    %v1103 = vunpack.c.h.b16 %v239
    %v1104 = vunpack.c.l.b16 %v240
    %v1105 = vunpack.c.h.b16 %v240
    %v1106 = vunpack.c.l.b16 %v241
    %v1107 = vunpack.c.h.b16 %v241
    %v1108 = vunpack.c.l.b16 %v242
    %v1109 = vunpack.c.h.b16 %v242
    %v1110 = vunpack.c.l.b16 %v243
    %v1111 = vunpack.c.h.b16 %v243
    %v1112 = vunpack.c.l.b16 %v244
    %v1113 = vunpack.c.h.b16 %v244
    %v1114 = vunpack.c.l.b16 %v245
    %v1115 = vunpack.c.h.b16 %v245
    %v1116 = vunpack.c.l.b16 %v246
    %v1117 = vunpack.c.h.b16 %v246
    %v1118 = vunpack.c.l.b16 %v247
    %v1119 = vunpack.c.h.b16 %v247
    %v1120 = vunpack.c.l.b16 %v248
    %v1121 = vunpack.c.h.b16 %v248
    %v1122 = vunpack.c.l.b16 %v249
    %v1123 = vunpack.c.h.b16 %v249
    %v1124 = vunpack.c.l.b16 %v250
    %v1125 = vunpack.c.h.b16 %v250
    %v1126 = vunpack.c.l.b16 %v251
    %v1127 = vunpack.c.h.b16 %v251
    %v1128 = vunpack.c.l.b16 %v252
    %v1129 = vunpack.c.h.b16 %v252
    %v1130 = vunpack.c.l.b16 %v253
    %v1131 = vunpack.c.h.b16 %v253
    %v1132 = vunpack.c.l.b16 %v254
    %v1133 = vunpack.c.h.b16 %v254
    %v1134 = vunpack.c.l.b16 %v255
    %v1135 = vunpack.c.h.b16 %v255
    %v1136 = vunpack.c.l.b16 %v256
    %v1137 = vunpack.c.h.b16 %v256
    %v1138 = vunpack.c.l.b16 %v257
    %v1139 = vunpack.c.h.b16 %v257
    %v1140 = vunpack.c.l.b16 %v258
    %v1141 = vunpack.c.h.b16 %v258
    %v1142 = vunpack.c.l.b16 %v259
    %v1143 = vunpack.c.h.b16 %v259
    %v1144 = vunpack.c.l.b16 %v260
    %v1145 = vunpack.c.h.b16 %v260
    %v1146 = vunpack.c.l.b16 %v261
    %v1147 = vunpack.c.h.b16 %v261
    %v1148 = vunpack.c.l.b16 %v262
    %v1149 = vunpack.c.h.b16 %v262
    %v1150 = vunpack.c.l.b16 %v263
    %v1151 = vunpack.c.h.b16 %v263
    %v1152 = vunpack.c.l.b16 %v264
    %v1153 = vunpack.c.h.b16 %v264
    %v1154 = vunpack.c.l.b16 %v265
    %v1155 = vunpack.c.h.b16 %v265
    %v1156 = vunpack.c.l.b16 %v266
    %v1157 = vunpack.c.h.b16 %v266
    %v1158 = vunpack.c.l.b16 %v267
    %v1159 = vunpack.c.h.b16 %v267
    %v1160 = vunpack.c.l.b16 %v268
    %v1161 = vunpack.c.h.b16 %v268
    %v1162 = vunpack.c.l.b16 %v269
    %v1163 = vunpack.c.h.b16 %v269
    %v1164 = vunpack.c.l.b16 %v270
    %v1165 = vunpack.c.h.b16 %v270
    %v1166 = vunpack.c.l.b16 %v271
    %v1167 = vunpack.c.h.b16 %v271
    %v1168 = vunpack.c.l.b16 %v272
    %v1169 = vunpack.c.h.b16 %v272
    %v1170 = vunpack.c.l.b16 %v273
    %v1171 = vunpack.c.h.b16 %v273
    %v1172 = vunpack.c.l.b16 %v274
    %v1173 = vunpack.c.h.b16 %v274
    %v1174 = vunpack.c.l.b16 %v275
    %v1175 = vunpack.c.h.b16 %v275
    %v1176 = vunpack.c.l.b16 %v276
    %v1177 = vunpack.c.h.b16 %v276
    %v1178 = vunpack.c.l.b16 %v277
    %v1179 = vunpack.c.h.b16 %v277
    %v1180 = vunpack.c.l.b16 %v278
    %v1181 = vunpack.c.h.b16 %v278
    %v1182 = vunpack.c.l.b16 %v279
    %v1183 = vunpack.c.h.b16 %v279
    %v1184 = vunpack.c.l.b16 %v280
    %v1185 = vunpack.c.h.b16 %v280
    %v1186 = vunpack.c.l.b16 %v281
    %v1187 = vunpack.c.h.b16 %v281
    %v1188 = vunpack.c.l.b16 %v282
    %v1189 = vunpack.c.h.b16 %v282
    %v1190 = vunpack.c.l.b16 %v283
    %v1191 = vunpack.c.h.b16 %v283
    %v1192 = vunpack.c.l.b16 %v284
    %v1193 = vunpack.c.h.b16 %v284
    %v1194 = vunpack.c.l.b16 %v285
    %v1195 = vunpack.c.h.b16 %v285
    %v1196 = vunpack.c.l.b16 %v286
    %v1197 = vunpack.c.h.b16 %v286
    %v1198 = vunpack.c.l.b16 %v287
    %v1199 = vunpack.c.h.b16 %v287
    %v1200 = vunpack.c.l.b16 %v288
    %v1201 = vunpack.c.h.b16 %v288
    %v1202 = vunpack.c.l.b16 %v289
    %v1203 = vunpack.c.h.b16 %v289
    %v1204 = vunpack.c.l.b16 %v290
    %v1205 = vunpack.c.h.b16 %v290
    %v1206 = vunpack.c.l.b16 %v291
    %v1207 = vunpack.c.h.b16 %v291
    %v1208 = vunpack.c.l.b16 %v292
    %v1209 = vunpack.c.h.b16 %v292
    %v1210 = vunpack.c.l.b16 %v293
    %v1211 = vunpack.c.h.b16 %v293
    %v1212 = vunpack.c.l.b16 %v294
    %v1213 = vunpack.c.h.b16 %v294
    %v1214 = vunpack.c.l.b16 %v295
    %v1215 = vunpack.c.h.b16 %v295
    %v1216 = vunpack.c.l.b16 %v296
    %v1217 = vunpack.c.h.b16 %v296
    %v1218 = vunpack.c.l.b16 %v297
    %v1219 = vunpack.c.h.b16 %v297
    %v1220 = vunpack.c.l.b16 %v298
    %v1221 = vunpack.c.h.b16 %v298
    %v1222 = vunpack.c.l.b16 %v299
    %v1223 = vunpack.c.h.b16 %v299
    %v1224 = vunpack.c.l.b16 %v300
    %v1225 = vunpack.c.h.b16 %v300
    %v1226 = vunpack.c.l.b16 %v301
    %v1227 = vunpack.c.h.b16 %v301
    %v1228 = vunpack.c.l.b16 %v302
    %v1229 = vunpack.c.h.b16 %v302
    %v1230 = vunpack.c.l.b16 %v303
    %v1231 = vunpack.c.h.b16 %v303
    %v1232 = vunpack.c.l.b16 %v304
    %v1233 = vunpack.c.h.b16 %v304
    %v1234 = vunpack.c.l.b16 %v305
    %v1235 = vunpack.c.h.b16 %v305
    %v1236 = vunpack.c.l.b16 %v306
    %v1237 = vunpack.c.h.b16 %v306
    %v1238 = vunpack.c.l.b16 %v307
    %v1239 = vunpack.c.h.b16 %v307
    %v1240 = vunpack.c.l.b16 %v308
    %v1241 = vunpack.c.h.b16 %v308
    %v1242 = vunpack.c.l.b16 %v309
    %v1243 = vunpack.c.h.b16 %v309
    %v1244 = vunpack.c.l.b16 %v310
    %v1245 = vunpack.c.h.b16 %v310
    %v1246 = vunpack.c.l.b16 %v311
    %v1247 = vunpack.c.h.b16 %v311
    %v1248 = vunpack.c.l.b16 %v312
    %v1249 = vunpack.c.h.b16 %v312
    %v1250 = vunpack.c.l.b16 %v313
    %v1251 = vunpack.c.h.b16 %v313
    %v1252 = vunpack.c.l.b16 %v314
    %v1253 = vunpack.c.h.b16 %v314
    %v1254 = vunpack.c.l.b16 %v315
    %v1255 = vunpack.c.h.b16 %v315
    %v1256 = vunpack.c.l.b16 %v316
    %v1257 = vunpack.c.h.b16 %v316
    %v1258 = vunpack.c.l.b16 %v317
    %v1259 = vunpack.c.h.b16 %v317
    %v1260 = vunpack.c.l.b16 %v318
    %v1261 = vunpack.c.h.b16 %v318
    %v1262 = vunpack.c.l.b16 %v319
    %v1263 = vunpack.c.h.b16 %v319
    %v1264 = vunpack.c.l.b16 %v320
    %v1265 = vunpack.c.h.b16 %v320
    %v1266 = vunpack.c.l.b16 %v321
    %v1267 = vunpack.c.h.b16 %v321
    %v1268 = vunpack.c.l.b16 %v322
    %v1269 = vunpack.c.h.b16 %v322
    %v1270 = vunpack.c.l.b16 %v323
    %v1271 = vunpack.c.h.b16 %v323
    %v1272 = vunpack.c.l.b16 %v324
    %v1273 = vunpack.c.h.b16 %v324
    %v1274 = vunpack.c.l.b16 %v325
    %v1275 = vunpack.c.h.b16 %v325
    %v1276 = vunpack.c.l.b16 %v326
    %v1277 = vunpack.c.h.b16 %v326
    %v1278 = vunpack.c.l.b16 %v327
    %v1279 = vunpack.c.h.b16 %v327
    %v1280 = vunpack.c.l.b16 %v328
    %v1281 = vunpack.c.h.b16 %v328
    %v1282 = vunpack.c.l.b16 %v329
    %v1283 = vunpack.c.h.b16 %v329
    %v1284 = vunpack.c.l.b16 %v330
    %v1285 = vunpack.c.h.b16 %v330
    %v1286 = vunpack.c.l.b16 %v331
    %v1287 = vunpack.c.h.b16 %v331
    %v1288 = vunpack.c.l.b16 %v332
    %v1289 = vunpack.c.h.b16 %v332
    %v1290 = vunpack.c.l.b16 %v333
    %v1291 = vunpack.c.h.b16 %v333
    %v1292 = vunpack.c.l.b16 %v334
    %v1293 = vunpack.c.h.b16 %v334
    %v1294 = vunpack.c.l.b16 %v335
    %v1295 = vunpack.c.h.b16 %v335
    %v1296 = vunpack.c.l.b16 %v336
    %v1297 = vunpack.c.h.b16 %v336
    %v1298 = vunpack.c.l.b16 %v337
    %v1299 = vunpack.c.h.b16 %v337
    %v1300 = vunpack.c.l.b16 %v338
    %v1301 = vunpack.c.h.b16 %v338
    %v1302 = vunpack.c.l.b16 %v339
    %v1303 = vunpack.c.h.b16 %v339
    %v1304 = vunpack.c.l.b16 %v340
    %v1305 = vunpack.c.h.b16 %v340
    %v1306 = vunpack.c.l.b16 %v341
    %v1307 = vunpack.c.h.b16 %v341
    %v1308 = vunpack.c.l.b16 %v342
    %v1309 = vunpack.c.h.b16 %v342
    %v1310 = vunpack.c.l.b16 %v343
    %v1311 = vunpack.c.h.b16 %v343
    %v1312 = vunpack.c.l.b16 %v344
    %v1313 = vunpack.c.h.b16 %v344
    %v1314 = vunpack.c.l.b16 %v345
    %v1315 = vunpack.c.h.b16 %v345
    %v1316 = vunpack.c.l.b16 %v346
    %v1317 = vunpack.c.h.b16 %v346
    %v1318 = vunpack.c.l.b16 %v347
    %v1319 = vunpack.c.h.b16 %v347
    %v1320 = vunpack.c.l.b16 %v348
    %v1321 = vunpack.c.h.b16 %v348
    %v1322 = vunpack.c.l.b16 %v349
    %v1323 = vunpack.c.h.b16 %v349
    %v1324 = vunpack.c.l.b16 %v350
    %v1325 = vunpack.c.h.b16 %v350
    %v1326 = vunpack.c.l.b16 %v351
    %v1327 = vunpack.c.h.b16 %v351
    %v1328 = vunpack.c.l.b16 %v352
    %v1329 = vunpack.c.h.b16 %v352
    %v1330 = vunpack.c.l.b16 %v353
    %v1331 = vunpack.c.h.b16 %v353
    %v1332 = vunpack.c.l.b16 %v354
    %v1333 = vunpack.c.h.b16 %v354
    %v1334 = vunpack.c.l.b16 %v355
    %v1335 = vunpack.c.h.b16 %v355
    %v1336 = vunpack.c.l.b16 %v356
    %v1337 = vunpack.c.h.b16 %v356
    %v1338 = vunpack.c.l.b16 %v357
    %v1339 = vunpack.c.h.b16 %v357
    %v1340 = vunpack.c.l.b16 %v358
    %v1341 = vunpack.c.h.b16 %v358
    %v1342 = vunpack.c.l.b16 %v359
    %v1343 = vunpack.c.h.b16 %v359
    %v1344 = vunpack.c.l.b16 %v360
    %v1345 = vunpack.c.h.b16 %v360
    %v1346 = vunpack.c.l.b16 %v361
    %v1347 = vunpack.c.h.b16 %v361
    %v1348 = vunpack.c.l.b16 %v362
    %v1349 = vunpack.c.h.b16 %v362
    %v1350 = vunpack.c.l.b16 %v363
    %v1351 = vunpack.c.h.b16 %v363
    %v1352 = vunpack.c.l.b16 %v364
    %v1353 = vunpack.c.h.b16 %v364
    %v1354 = vunpack.c.l.b16 %v365
    %v1355 = vunpack.c.h.b16 %v365
    %v1356 = vunpack.c.l.b16 %v366
    %v1357 = vunpack.c.h.b16 %v366
    %v1358 = vunpack.c.l.b16 %v367
    %v1359 = vunpack.c.h.b16 %v367
    %v1360 = vunpack.c.l.b16 %v368
    %v1361 = vunpack.c.h.b16 %v368
    %v1362 = vunpack.c.l.b16 %v369
    %v1363 = vunpack.c.h.b16 %v369
    %v1364 = vunpack.c.l.b16 %v370
    %v1365 = vunpack.c.h.b16 %v370
    %v1366 = vunpack.c.l.b16 %v371
    %v1367 = vunpack.c.h.b16 %v371
    %v1368 = vunpack.c.l.b16 %v372
    %v1369 = vunpack.c.h.b16 %v372
    %v1370 = vunpack.c.l.b16 %v373
    %v1371 = vunpack.c.h.b16 %v373
    %v1372 = vunpack.c.l.b16 %v374
    %v1373 = vunpack.c.h.b16 %v374
    %v1374 = vunpack.c.l.b16 %v375
    %v1375 = vunpack.c.h.b16 %v375
    %v1376 = vunpack.c.l.b16 %v376
    %v1377 = vunpack.c.h.b16 %v376
    %v1378 = vunpack.c.l.b16 %v377
    %v1379 = vunpack.c.h.b16 %v377
    %v1380 = vunpack.c.l.b16 %v378
    %v1381 = vunpack.c.h.b16 %v378
    %v1382 = vunpack.c.l.b16 %v379
    %v1383 = vunpack.c.h.b16 %v379
    %v1384 = vunpack.c.l.b16 %v380
    %v1385 = vunpack.c.h.b16 %v380
    %v1386 = vunpack.c.l.b16 %v381
    %v1387 = vunpack.c.h.b16 %v381
    %v1388 = vunpack.c.l.b16 %v382
    %v1389 = vunpack.c.h.b16 %v382
    %v1390 = vunpack.c.l.b16 %v383
    %v1391 = vunpack.c.h.b16 %v383
    %v1392 = vunpack.c.l.b16 %v384
    %v1393 = vunpack.c.h.b16 %v384
    %v1394 = vunpack.c.l.b16 %v385
    %v1395 = vunpack.c.h.b16 %v385
    %v1396 = vunpack.c.l.b16 %v386
    %v1397 = vunpack.c.h.b16 %v386
    %v1398 = vunpack.c.l.b16 %v387
    %v1399 = vunpack.c.h.b16 %v387
    %v1400 = vunpack.c.l.b16 %v388
    %v1401 = vunpack.c.h.b16 %v388
    %v1402 = vunpack.c.l.b16 %v389
    %v1403 = vunpack.c.h.b16 %v389
    %v1404 = vunpack.c.l.b16 %v390
    %v1405 = vunpack.c.h.b16 %v390
    %v1406 = vunpack.c.l.b16 %v391
    %v1407 = vunpack.c.h.b16 %v391
    %v1408 = vunpack.c.l.b16 %v392
    %v1409 = vunpack.c.h.b16 %v392
    %v1410 = vunpack.c.l.b16 %v393
    %v1411 = vunpack.c.h.b16 %v393
    %v1412 = vunpack.c.l.b16 %v394
    %v1413 = vunpack.c.h.b16 %v394
    %v1414 = vunpack.c.l.b16 %v395
    %v1415 = vunpack.c.h.b16 %v395
    %v1416 = vunpack.c.l.b16 %v396
    %v1417 = vunpack.c.h.b16 %v396
    %v1418 = vunpack.c.l.b16 %v397
    %v1419 = vunpack.c.h.b16 %v397
    %v1420 = vunpack.c.l.b16 %v398
    %v1421 = vunpack.c.h.b16 %v398
    %v1422 = vunpack.c.l.b16 %v399
    %v1423 = vunpack.c.h.b16 %v399
    %v1424 = vunpack.c.l.b16 %v400
    %v1425 = vunpack.c.h.b16 %v400
    %v1426 = vunpack.c.l.b16 %v401
    %v1427 = vunpack.c.h.b16 %v401
    %v1428 = vunpack.c.l.b16 %v402
    %v1429 = vunpack.c.h.b16 %v402
    %v1430 = vunpack.c.l.b16 %v403
    %v1431 = vunpack.c.h.b16 %v403
    %v1432 = vunpack.c.l.b16 %v404
    %v1433 = vunpack.c.h.b16 %v404
    %v1434 = vunpack.c.l.b16 %v405
    %v1435 = vunpack.c.h.b16 %v405
    %v1436 = vunpack.c.l.b16 %v406
    %v1437 = vunpack.c.h.b16 %v406
    %v1438 = vunpack.c.l.b16 %v407
    %v1439 = vunpack.c.h.b16 %v407
    %v1440 = vunpack.c.l.b16 %v408
    %v1441 = vunpack.c.h.b16 %v408
    %v1442 = vunpack.c.l.b16 %v409
    %v1443 = vunpack.c.h.b16 %v409
    %v1444 = vunpack.c.l.b16 %v410
    %v1445 = vunpack.c.h.b16 %v410
    %v1446 = vunpack.c.l.b16 %v411
    %v1447 = vunpack.c.h.b16 %v411
    %v1448 = vunpack.c.l.b16 %v412
    %v1449 = vunpack.c.h.b16 %v412
    %v1450 = vunpack.c.l.b16 %v413
    %v1451 = vunpack.c.h.b16 %v413
    %v1452 = vunpack.c.l.b16 %v414
    %v1453 = vunpack.c.h.b16 %v414
    %v1454 = vunpack.c.l.b16 %v415
    %v1455 = vunpack.c.h.b16 %v415
    %v1456 = vunpack.c.l.b16 %v416
    %v1457 = vunpack.c.h.b16 %v416
    %v1458 = vunpack.c.l.b16 %v417
    %v1459 = vunpack.c.h.b16 %v417
    %v1460 = vunpack.c.l.b16 %v418
    %v1461 = vunpack.c.h.b16 %v418
    %v1462 = vunpack.c.l.b16 %v419
    %v1463 = vunpack.c.h.b16 %v419
    %v1464 = vunpack.c.l.b16 %v420
    %v1465 = vunpack.c.h.b16 %v420
    %v1466 = vunpack.c.l.b16 %v421
    %v1467 = vunpack.c.h.b16 %v421
    %v1468 = vunpack.c.l.b16 %v422
    %v1469 = vunpack.c.h.b16 %v422
    %v1470 = vunpack.c.l.b16 %v423
    %v1471 = vunpack.c.h.b16 %v423
    %v1472 = vunpack.c.l.b16 %v424
    %v1473 = vunpack.c.h.b16 %v424
    %v1474 = vunpack.c.l.b16 %v425
    %v1475 = vunpack.c.h.b16 %v425
    %v1476 = vunpack.c.l.b16 %v426
    %v1477 = vunpack.c.h.b16 %v426
    %v1478 = vunpack.c.l.b16 %v427
    %v1479 = vunpack.c.h.b16 %v427
    %v1480 = vunpack.c.l.b16 %v428
    %v1481 = vunpack.c.h.b16 %v428
    %v1482 = vunpack.c.l.b16 %v429
    %v1483 = vunpack.c.h.b16 %v429
    %v1484 = vunpack.c.l.b16 %v430
    %v1485 = vunpack.c.h.b16 %v430
    %v1486 = vunpack.c.l.b16 %v431
    %v1487 = vunpack.c.h.b16 %v431
    %v1488 = vunpack.c.l.b16 %v432
    %v1489 = vunpack.c.h.b16 %v432
    %v1490 = vunpack.c.l.b16 %v433
    %v1491 = vunpack.c.h.b16 %v433
    %v1492 = vunpack.c.l.b16 %v434
    %v1493 = vunpack.c.h.b16 %v434
    %v1494 = vunpack.c.l.b16 %v435
    %v1495 = vunpack.c.h.b16 %v435
    %v1496 = vunpack.c.l.b16 %v436
    %v1497 = vunpack.c.h.b16 %v436
    %v1498 = vunpack.c.l.b16 %v437
    %v1499 = vunpack.c.h.b16 %v437
    %v1500 = vunpack.c.l.b16 %v438
    %v1501 = vunpack.c.h.b16 %v438
    %v1502 = vunpack.c.l.b16 %v439
    %v1503 = vunpack.c.h.b16 %v439
    %v1504 = vunpack.c.l.b16 %v440
    %v1505 = vunpack.c.h.b16 %v440
    %v1506 = vunpack.c.l.b16 %v441
    %v1507 = vunpack.c.h.b16 %v441
    %v1508 = vunpack.c.l.b16 %v442
    %v1509 = vunpack.c.h.b16 %v442
    %v1510 = vunpack.c.l.b16 %v443
    %v1511 = vunpack.c.h.b16 %v443
    %v1512 = vunpack.c.l.b16 %v444
    %v1513 = vunpack.c.h.b16 %v444
    %v1514 = vunpack.c.l.b16 %v445
    %v1515 = vunpack.c.h.b16 %v445
    %v1516 = vunpack.c.l.b16 %v446
    %v1517 = vunpack.c.h.b16 %v446
    %v1518 = vunpack.c.l.b16 %v447
    %v1519 = vunpack.c.h.b16 %v447
    %v1520 = vunpack.c.l.b16 %v448
    %v1521 = vunpack.c.h.b16 %v448
    %v1522 = vunpack.c.l.b16 %v449
    %v1523 = vunpack.c.h.b16 %v449
    %v1524 = vunpack.c.l.b16 %v450
    %v1525 = vunpack.c.h.b16 %v450
    %v1526 = vunpack.c.l.b16 %v451
    %v1527 = vunpack.c.h.b16 %v451
    %v1528 = vunpack.c.l.b16 %v452
    %v1529 = vunpack.c.h.b16 %v452
    %v1530 = vunpack.c.l.b16 %v453
    %v1531 = vunpack.c.h.b16 %v453
    %v1532 = vunpack.c.l.b16 %v454
    %v1533 = vunpack.c.h.b16 %v454
    %v1534 = vunpack.c.l.b16 %v455
    %v1535 = vunpack.c.h.b16 %v455
    %v1536 = vunpack.c.l.b16 %v456
    %v1537 = vunpack.c.h.b16 %v456
    %v1538 = vunpack.c.l.b16 %v457
    %v1539 = vunpack.c.h.b16 %v457
    %v1540 = vunpack.c.l.b16 %v458
    %v1541 = vunpack.c.h.b16 %v458
    %v1542 = vunpack.c.l.b16 %v459
    %v1543 = vunpack.c.h.b16 %v459
    %v1544 = vunpack.c.l.b16 %v460
    %v1545 = vunpack.c.h.b16 %v460
    %v1546 = vunpack.c.l.b16 %v461
    %v1547 = vunpack.c.h.b16 %v461
    %v1548 = vunpack.c.l.b16 %v462
    %v1549 = vunpack.c.h.b16 %v462
    %v1550 = vunpack.c.l.b16 %v463
    %v1551 = vunpack.c.h.b16 %v463
    %v1552 = vunpack.c.l.b16 %v464
    %v1553 = vunpack.c.h.b16 %v464
    %v1554 = vunpack.c.l.b16 %v465
    %v1555 = vunpack.c.h.b16 %v465
    %v1556 = vunpack.c.l.b16 %v466
    %v1557 = vunpack.c.h.b16 %v466
    %v1558 = vunpack.c.l.b16 %v467
    %v1559 = vunpack.c.h.b16 %v467
    %v1560 = vunpack.c.l.b16 %v468
    %v1561 = vunpack.c.h.b16 %v468
    %v1562 = vunpack.c.l.b16 %v469
    %v1563 = vunpack.c.h.b16 %v469
    %v1564 = vunpack.c.l.b16 %v470
    %v1565 = vunpack.c.h.b16 %v470
    %v1566 = vunpack.c.l.b16 %v471
    %v1567 = vunpack.c.h.b16 %v471
    %v1568 = vunpack.c.l.b16 %v472
    %v1569 = vunpack.c.h.b16 %v472
    %v1570 = vunpack.c.l.b16 %v473
    %v1571 = vunpack.c.h.b16 %v473
    %v1572 = vunpack.c.l.b16 %v474
    %v1573 = vunpack.c.h.b16 %v474
    %v1574 = vunpack.c.l.b16 %v475
    %v1575 = vunpack.c.h.b16 %v475
    %v1576 = vunpack.c.l.b16 %v476
    %v1577 = vunpack.c.h.b16 %v476
    %v1578 = vunpack.c.l.b16 %v477
    %v1579 = vunpack.c.h.b16 %v477
    %v1580 = vunpack.c.l.b16 %v478
    %v1581 = vunpack.c.h.b16 %v478
    %v1582 = vunpack.c.l.b16 %v479
    %v1583 = vunpack.c.h.b16 %v479
    %v1584 = vunpack.c.l.b16 %v480
    %v1585 = vunpack.c.h.b16 %v480
    %v1586 = vunpack.c.l.b16 %v481
    %v1587 = vunpack.c.h.b16 %v481
    %v1588 = vunpack.c.l.b16 %v482
    %v1589 = vunpack.c.h.b16 %v482
    %v1590 = vunpack.c.l.b16 %v483
    %v1591 = vunpack.c.h.b16 %v483
    %v1592 = vunpack.c.l.b16 %v484
    %v1593 = vunpack.c.h.b16 %v484
    %v1594 = vunpack.c.l.b16 %v485
    %v1595 = vunpack.c.h.b16 %v485
    %v1596 = vunpack.c.l.b16 %v486
    %v1597 = vunpack.c.h.b16 %v486
    %v1598 = vunpack.c.l.b16 %v487
    %v1599 = vunpack.c.h.b16 %v487
    %v1600 = vunpack.c.l.b16 %v488
    %v1601 = vunpack.c.h.b16 %v488
    %v1602 = vunpack.c.l.b16 %v489
    %v1603 = vunpack.c.h.b16 %v489
    %v1604 = vunpack.c.l.b16 %v490
    %v1605 = vunpack.c.h.b16 %v490
    %v1606 = vunpack.c.l.b16 %v491
    %v1607 = vunpack.c.h.b16 %v491
    %v1608 = vunpack.c.l.b16 %v492
    %v1609 = vunpack.c.h.b16 %v492
    %v1610 = vunpack.c.l.b16 %v493
    %v1611 = vunpack.c.h.b16 %v493
    %v1612 = vunpack.c.l.b16 %v494
    %v1613 = vunpack.c.h.b16 %v494
    %v1614 = vunpack.c.l.b16 %v495
    %v1615 = vunpack.c.h.b16 %v495
    %v1616 = vunpack.c.l.b16 %v496
    %v1617 = vunpack.c.h.b16 %v496
    %v1618 = vunpack.c.l.b16 %v497
    %v1619 = vunpack.c.h.b16 %v497
    %v1620 = vunpack.c.l.b16 %v498
    %v1621 = vunpack.c.h.b16 %v498
    %v1622 = vunpack.c.l.b16 %v499
    %v1623 = vunpack.c.h.b16 %v499
    %v1624 = vunpack.c.l.b16 %v500
    %v1625 = vunpack.c.h.b16 %v500
    %v1626 = vunpack.c.l.b16 %v501
    %v1627 = vunpack.c.h.b16 %v501
    %v1628 = vunpack.c.l.b16 %v502
    %v1629 = vunpack.c.h.b16 %v502
    %v1630 = vunpack.c.l.b16 %v503
    %v1631 = vunpack.c.h.b16 %v503
    %v1632 = vunpack.c.l.b16 %v504
    %v1633 = vunpack.c.h.b16 %v504
    %v1634 = vunpack.c.l.b16 %v505
    %v1635 = vunpack.c.h.b16 %v505
    %v1636 = vunpack.c.l.b16 %v506
    %v1637 = vunpack.c.h.b16 %v506
    %v1638 = vunpack.c.l.b16 %v507
    %v1639 = vunpack.c.h.b16 %v507
    %v1640 = vunpack.c.l.b16 %v508
    %v1641 = vunpack.c.h.b16 %v508
    %v1642 = vunpack.c.l.b16 %v509
    %v1643 = vunpack.c.h.b16 %v509
    %v1644 = vunpack.c.l.b16 %v510
    %v1645 = vunpack.c.h.b16 %v510
    %v1646 = vunpack.c.l.b16 %v511
    %v1647 = vunpack.c.h.b16 %v511
    %v1648 = vunpack.c.l.b16 %v512
    %v1649 = vunpack.c.h.b16 %v512
    %v1650 = vunpack.c.l.b16 %v513
    %v1651 = vunpack.c.h.b16 %v513
    %v1652 = vunpack.c.l.b16 %v514
    %v1653 = vunpack.c.h.b16 %v514
    %v1654 = vunpack.c.l.b16 %v515
    %v1655 = vunpack.c.h.b16 %v515
    %v1656 = vunpack.c.l.b16 %v516
    %v1657 = vunpack.c.h.b16 %v516
    %v1658 = vunpack.c.l.b16 %v517
    %v1659 = vunpack.c.h.b16 %v517
    %v1660 = vunpack.c.l.b16 %v518
    %v1661 = vunpack.c.h.b16 %v518
    %v1662 = vunpack.c.l.b16 %v519
    %v1663 = vunpack.c.h.b16 %v519
    %v1664 = vunpack.c.l.b16 %v520
    %v1665 = vunpack.c.h.b16 %v520
    %v1666 = vunpack.c.l.b16 %v521
    %v1667 = vunpack.c.h.b16 %v521
    %v1668 = vunpack.c.l.b16 %v522
    %v1669 = vunpack.c.h.b16 %v522
    %v1670 = vunpack.c.l.b16 %v523
    %v1671 = vunpack.c.h.b16 %v523
    %v1672 = vunpack.c.l.b16 %v524
    %v1673 = vunpack.c.h.b16 %v524
    %v1674 = vunpack.c.l.b16 %v525
    %v1675 = vunpack.c.h.b16 %v525
    %v1676 = vunpack.c.l.b16 %v526
    %v1677 = vunpack.c.h.b16 %v526
    %v1678 = vunpack.c.l.b16 %v527
    %v1679 = vunpack.c.h.b16 %v527
    %v1680 = vunpack.c.l.b16 %v528
    %v1681 = vunpack.c.h.b16 %v528
    %v1682 = vunpack.c.l.b16 %v529
    %v1683 = vunpack.c.h.b16 %v529
    %v1684 = vunpack.c.l.b16 %v530
    %v1685 = vunpack.c.h.b16 %v530
    %v1686 = vunpack.c.l.b16 %v531
    %v1687 = vunpack.c.h.b16 %v531
    %v1688 = vunpack.c.l.b16 %v532
    %v1689 = vunpack.c.h.b16 %v532
    %v1690 = vunpack.c.l.b16 %v533
    %v1691 = vunpack.c.h.b16 %v533
    %v1692 = vunpack.c.l.b16 %v534
    %v1693 = vunpack.c.h.b16 %v534
    %v1694 = vunpack.c.l.b16 %v535
    %v1695 = vunpack.c.h.b16 %v535
    %v1696 = vunpack.c.l.b16 %v536
    %v1697 = vunpack.c.h.b16 %v536
    %v1698 = vunpack.c.l.b16 %v537
    %v1699 = vunpack.c.h.b16 %v537
    %v1700 = vunpack.c.l.b16 %v538
    %v1701 = vunpack.c.h.b16 %v538
    %v1702 = vunpack.c.l.b16 %v539
    %v1703 = vunpack.c.h.b16 %v539
    %v1704 = vunpack.c.l.b16 %v540
    %v1705 = vunpack.c.h.b16 %v540
    %v1706 = vunpack.c.l.b16 %v541
    %v1707 = vunpack.c.h.b16 %v541
    %v1708 = vunpack.c.l.b16 %v542
    %v1709 = vunpack.c.h.b16 %v542
    %v1710 = vunpack.c.l.b16 %v543
    %v1711 = vunpack.c.h.b16 %v543
    %v1712 = vunpack.c.l.b16 %v544
    %v1713 = vunpack.c.h.b16 %v544
    %v1714 = vunpack.c.l.b16 %v545
    %v1715 = vunpack.c.h.b16 %v545
    %v1716 = vunpack.c.l.b16 %v546
    %v1717 = vunpack.c.h.b16 %v546
    %v1718 = vunpack.c.l.b16 %v547
    %v1719 = vunpack.c.h.b16 %v547
    %v1720 = vunpack.c.l.b16 %v548
    %v1721 = vunpack.c.h.b16 %v548
    %v1722 = vunpack.c.l.b16 %v549
    %v1723 = vunpack.c.h.b16 %v549
    %v1724 = vunpack.c.l.b16 %v550
    %v1725 = vunpack.c.h.b16 %v550
    %v1726 = vunpack.c.l.b16 %v551
    %v1727 = vunpack.c.h.b16 %v551
    %v1728 = vunpack.c.l.b16 %v552
    %v1729 = vunpack.c.h.b16 %v552
    %v1730 = vunpack.c.l.b16 %v553
    %v1731 = vunpack.c.h.b16 %v553
    %v1732 = vunpack.c.l.b16 %v554
    %v1733 = vunpack.c.h.b16 %v554
    %v1734 = vunpack.c.l.b16 %v555
    %v1735 = vunpack.c.h.b16 %v555
    %v1736 = vunpack.c.l.b16 %v556
    %v1737 = vunpack.c.h.b16 %v556
    %v1738 = vunpack.c.l.b16 %v557
    %v1739 = vunpack.c.h.b16 %v557
    %v1740 = vunpack.c.l.b16 %v558
    %v1741 = vunpack.c.h.b16 %v558
    %v1742 = vunpack.c.l.b16 %v559
    %v1743 = vunpack.c.h.b16 %v559
    %v1744 = vunpack.c.l.b16 %v560
    %v1745 = vunpack.c.h.b16 %v560
    %v1746 = vunpack.c.l.b16 %v561
    %v1747 = vunpack.c.h.b16 %v561
    %v1748 = vunpack.c.l.b16 %v562
    %v1749 = vunpack.c.h.b16 %v562
    %v1750 = vunpack.c.l.b16 %v563
    %v1751 = vunpack.c.h.b16 %v563
    %v1752 = vunpack.c.l.b16 %v564
    %v1753 = vunpack.c.h.b16 %v564
    %v1754 = vunpack.c.l.b16 %v565
    %v1755 = vunpack.c.h.b16 %v565
    %v1756 = vunpack.c.l.b16 %v566
    %v1757 = vunpack.c.h.b16 %v566
    %v1758 = vunpack.c.l.b16 %v567
    %v1759 = vunpack.c.h.b16 %v567
    %v1760 = vunpack.c.l.b16 %v568
    %v1761 = vunpack.c.h.b16 %v568
    %v1762 = vunpack.c.l.b16 %v569
    %v1763 = vunpack.c.h.b16 %v569
    %v1764 = vunpack.c.l.b16 %v570
    %v1765 = vunpack.c.h.b16 %v570
    %v1766 = vunpack.c.l.b16 %v571
    %v1767 = vunpack.c.h.b16 %v571
    %v1768 = vunpack.c.l.b16 %v572
    %v1769 = vunpack.c.h.b16 %v572
    %v1770 = vunpack.c.l.b16 %v573
    %v1771 = vunpack.c.h.b16 %v573
    %v1772 = vunpack.c.l.b16 %v574
    %v1773 = vunpack.c.h.b16 %v574
    %v1774 = vunpack.c.l.b16 %v575
    %v1775 = vunpack.c.h.b16 %v575
    %v1776 = vunpack.c.l.b16 %v576
    %v1777 = vunpack.c.h.b16 %v576
    %v1778 = vunpack.c.l.b16 %v577
    %v1779 = vunpack.c.h.b16 %v577
    %v1780 = vunpack.c.l.b16 %v578
    %v1781 = vunpack.c.h.b16 %v578
    %v1782 = vunpack.c.l.b16 %v579
    %v1783 = vunpack.c.h.b16 %v579
    %v1784 = vunpack.c.l.b16 %v580
    %v1785 = vunpack.c.h.b16 %v580
    %v1786 = vunpack.c.l.b16 %v581
    %v1787 = vunpack.c.h.b16 %v581
    %v1788 = vunpack.c.l.b16 %v582
    %v1789 = vunpack.c.h.b16 %v582
    %v1790 = vunpack.c.l.b16 %v583
    %v1791 = vunpack.c.h.b16 %v583
    %v1792 = vunpack.c.l.b16 %v584
    %v1793 = vunpack.c.h.b16 %v584
    %v1794 = vunpack.c.l.b16 %v585
    %v1795 = vunpack.c.h.b16 %v585
    %v1796 = vunpack.c.l.b16 %v586
    %v1797 = vunpack.c.h.b16 %v586
    %v1798 = vunpack.c.l.b16 %v587
    %v1799 = vunpack.c.h.b16 %v587
    %v1800 = vunpack.c.l.b16 %v588
    %v1801 = vunpack.c.h.b16 %v588
    %v1802 = vunpack.c.l.b16 %v589
    %v1803 = vunpack.c.h.b16 %v589
    %v1804 = vunpack.c.l.b16 %v590
    %v1805 = vunpack.c.h.b16 %v590
    %v1806 = vunpack.c.l.b16 %v591
    %v1807 = vunpack.c.h.b16 %v591
    %v1808 = vpack.c.b16 %v1052, %v1040
    %v1809 = vpack.c.b16 %v1053, %v1041
    %v1810 = vpack.c.b16 %v1054, %v1042
    %v1811 = vpack.c.b16 %v1055, %v1043
    %v1812 = vpack.c.b16 %v1056, %v1044
    %v1813 = vpack.c.b16 %v1057, %v1045
    %v1814 = vpack.c.b16 %v1058, %v1046
    %v1815 = vpack.c.b16 %v1059, %v1047
    %v1816 = vpack.c.b16 %v1060, %v1048
    %v1817 = vpack.c.b16 %v1061, %v1049
    %v1818 = vpack.c.b16 %v1062, %v1050
    %v1819 = vpack.c.b16 %v1063, %v1051
    %v1820 = vpack.c.b16 %v1076, %v1064
    %v1821 = vpack.c.b16 %v1077, %v1065
    %v1822 = vpack.c.b16 %v1078, %v1066
    %v1823 = vpack.c.b16 %v1079, %v1067
    %v1824 = vpack.c.b16 %v1080, %v1068
    %v1825 = vpack.c.b16 %v1081, %v1069
    %v1826 = vpack.c.b16 %v1082, %v1070
    %v1827 = vpack.c.b16 %v1083, %v1071
    %v1828 = vpack.c.b16 %v1084, %v1072
    %v1829 = vpack.c.b16 %v1085, %v1073
    %v1830 = vpack.c.b16 %v1086, %v1074
    %v1831 = vpack.c.b16 %v1087, %v1075
    %v1832 = vpack.c.b16 %v1100, %v1088
    %v1833 = vpack.c.b16 %v1101, %v1089
    %v1834 = vpack.c.b16 %v1102, %v1090
    %v1835 = vpack.c.b16 %v1103, %v1091
    %v1836 = vpack.c.b16 %v1104, %v1092
    %v1837 = vpack.c.b16 %v1105, %v1093
    %v1838 = vpack.c.b16 %v1106, %v1094
    %v1839 = vpack.c.b16 %v1107, %v1095
    %v1840 = vpack.c.b16 %v1108, %v1096
    %v1841 = vpack.c.b16 %v1109, %v1097
    %v1842 = vpack.c.b16 %v1110, %v1098
    %v1843 = vpack.c.b16 %v1111, %v1099
    %v1844 = vpack.c.b16 %v1124, %v1112
    %v1845 = vpack.c.b16 %v1125, %v1113
    %v1846 = vpack.c.b16 %v1126, %v1114
    %v1847 = vpack.c.b16 %v1127, %v1115
    %v1848 = vpack.c.b16 %v1128, %v1116
    %v1849 = vpack.c.b16 %v1129, %v1117
    %v1850 = vpack.c.b16 %v1130, %v1118
    %v1851 = vpack.c.b16 %v1131, %v1119
    %v1852 = vpack.c.b16 %v1132, %v1120
    %v1853 = vpack.c.b16 %v1133, %v1121
    %v1854 = vpack.c.b16 %v1134, %v1122
    %v1855 = vpack.c.b16 %v1135, %v1123
    %v1856 = vpack.c.b16 %v1148, %v1136
    %v1857 = vpack.c.b16 %v1149, %v1137
    %v1858 = vpack.c.b16 %v1150, %v1138
    %v1859 = vpack.c.b16 %v1151, %v1139
    %v1860 = vpack.c.b16 %v1152, %v1140
    %v1861 = vpack.c.b16 %v1153, %v1141
    %v1862 = vpack.c.b16 %v1154, %v1142
    %v1863 = vpack.c.b16 %v1155, %v1143
    %v1864 = vpack.c.b16 %v1156, %v1144
    %v1865 = vpack.c.b16 %v1157, %v1145
    %v1866 = vpack.c.b16 %v1158, %v1146
    %v1867 = vpack.c.b16 %v1159, %v1147
    %v1868 = vpack.c.b16 %v1172, %v1160
    %v1869 = vpack.c.b16 %v1173, %v1161
    %v1870 = vpack.c.b16 %v1174, %v1162
    %v1871 = vpack.c.b16 %v1175, %v1163
    %v1872 = vpack.c.b16 %v1176, %v1164
    %v1873 = vpack.c.b16 %v1177, %v1165
    %v1874 = vpack.c.b16 %v1178, %v1166
    %v1875 = vpack.c.b16 %v1179, %v1167
    %v1876 = vpack.c.b16 %v1180, %v1168
    %v1877 = vpack.c.b16 %v1181, %v1169
    %v1878 = vpack.c.b16 %v1182, %v1170
    %v1879 = vpack.c.b16 %v1183, %v1171
    %v1880 = vpack.c.b16 %v1196, %v1184
    %v1881 = vpack.c.b16 %v1197, %v1185
    %v1882 = vpack.c.b16 %v1198, %v1186
    %v1883 = vpack.c.b16 %v1199, %v1187
    %v1884 = vpack.c.b16 %v1200, %v1188
    %v1885 = vpack.c.b16 %v1201, %v1189
    %v1886 = vpack.c.b16 %v1202, %v1190
    %v1887 = vpack.c.b16 %v1203, %v1191
    %v1888 = vpack.c.b16 %v1204, %v1192
    %v1889 = vpack.c.b16 %v1205, %v1193
    %v1890 = vpack.c.b16 %v1206, %v1194
    %v1891 = vpack.c.b16 %v1207, %v1195
    %v1892 = vpack.c.b16 %v1220, %v1208
    %v1893 = vpack.c.b16 %v1221, %v1209
    %v1894 = vpack.c.b16 %v1222, %v1210
    %v1895 = vpack.c.b16 %v1223, %v1211
    %v1896 = vpack.c.b16 %v1224, %v1212
    %v1897 = vpack.c.b16 %v1225, %v1213
    %v1898 = vpack.c.b16 %v1226, %v1214
    %v1899 = vpack.c.b16 %v1227, %v1215
    %v1900 = vpack.c.b16 %v1228, %v1216
    %v1901 = vpack.c.b16 %v1229, %v1217
    %v1902 = vpack.c.b16 %v1230, %v1218
    %v1903 = vpack.c.b16 %v1231, %v1219
    %v1904 = vpack.c.b16 %v1244, %v1232
    %v1905 = vpack.c.b16 %v1245, %v1233
    %v1906 = vpack.c.b16 %v1246, %v1234
    %v1907 = vpack.c.b16 %v1247, %v1235
    %v1908 = vpack.c.b16 %v1248, %v1236
    %v1909 = vpack.c.b16 %v1249, %v1237
    %v1910 = vpack.c.b16 %v1250, %v1238
    %v1911 = vpack.c.b16 %v1251, %v1239
    %v1912 = vpack.c.b16 %v1252, %v1240
    %v1913 = vpack.c.b16 %v1253, %v1241
    %v1914 = vpack.c.b16 %v1254, %v1242
    %v1915 = vpack.c.b16 %v1255, %v1243
    %v1916 = vpack.c.b16 %v1268, %v1256
    %v1917 = vpack.c.b16 %v1269, %v1257
    %v1918 = vpack.c.b16 %v1270, %v1258
    %v1919 = vpack.c.b16 %v1271, %v1259
    %v1920 = vpack.c.b16 %v1272, %v1260
    %v1921 = vpack.c.b16 %v1273, %v1261
    %v1922 = vpack.c.b16 %v1274, %v1262
    %v1923 = vpack.c.b16 %v1275, %v1263
    %v1924 = vpack.c.b16 %v1276, %v1264
    %v1925 = vpack.c.b16 %v1277, %v1265
    %v1926 = vpack.c.b16 %v1278, %v1266
    %v1927 = vpack.c.b16 %v1279, %v1267
    %v1928 = vpack.c.b16 %v1292, %v1280
    %v1929 = vpack.c.b16 %v1293, %v1281
    %v1930 = vpack.c.b16 %v1294, %v1282
    %v1931 = vpack.c.b16 %v1295, %v1283
    %v1932 = vpack.c.b16 %v1296, %v1284
    %v1933 = vpack.c.b16 %v1297, %v1285
    %v1934 = vpack.c.b16 %v1298, %v1286
    %v1935 = vpack.c.b16 %v1299, %v1287
    %v1936 = vpack.c.b16 %v1300, %v1288
    %v1937 = vpack.c.b16 %v1301, %v1289
    %v1938 = vpack.c.b16 %v1302, %v1290
    %v1939 = vpack.c.b16 %v1303, %v1291
    %v1940 = vpack.c.b16 %v1316, %v1304
    %v1941 = vpack.c.b16 %v1317, %v1305
    %v1942 = vpack.c.b16 %v1318, %v1306
    %v1943 = vpack.c.b16 %v1319, %v1307
    %v1944 = vpack.c.b16 %v1320, %v1308
    %v1945 = vpack.c.b16 %v1321, %v1309
    %v1946 = vpack.c.b16 %v1322, %v1310
    %v1947 = vpack.c.b16 %v1323, %v1311
    %v1948 = vpack.c.b16 %v1324, %v1312
    %v1949 = vpack.c.b16 %v1325, %v1313
    %v1950 = vpack.c.b16 %v1326, %v1314
    %v1951 = vpack.c.b16 %v1327, %v1315
    %v1952 = vpack.c.b16 %v1340, %v1328
    %v1953 = vpack.c.b16 %v1341, %v1329
    %v1954 = vpack.c.b16 %v1342, %v1330
    %v1955 = vpack.c.b16 %v1343, %v1331
    %v1956 = vpack.c.b16 %v1344, %v1332
    %v1957 = vpack.c.b16 %v1345, %v1333
    %v1958 = vpack.c.b16 %v1346, %v1334
    %v1959 = vpack.c.b16 %v1347, %v1335
    %v1960 = vpack.c.b16 %v1348, %v1336
    %v1961 = vpack.c.b16 %v1349, %v1337
    %v1962 = vpack.c.b16 %v1350, %v1338
    %v1963 = vpack.c.b16 %v1351, %v1339
    %v1964 = vpack.c.b16 %v1364, %v1352
    %v1965 = vpack.c.b16 %v1365, %v1353
    %v1966 = vpack.c.b16 %v1366, %v1354
    %v1967 = vpack.c.b16 %v1367, %v1355
    %v1968 = vpack.c.b16 %v1368, %v1356
    %v1969 = vpack.c.b16 %v1369, %v1357
    %v1970 = vpack.c.b16 %v1370, %v1358
    %v1971 = vpack.c.b16 %v1371, %v1359
    %v1972 = vpack.c.b16 %v1372, %v1360
    %v1973 = vpack.c.b16 %v1373, %v1361
    %v1974 = vpack.c.b16 %v1374, %v1362
    %v1975 = vpack.c.b16 %v1375, %v1363
    %v1976 = vpack.c.b16 %v1388, %v1376
    %v1977 = vpack.c.b16 %v1389, %v1377
    %v1978 = vpack.c.b16 %v1390, %v1378
    %v1979 = vpack.c.b16 %v1391, %v1379
    %v1980 = vpack.c.b16 %v1392, %v1380
    %v1981 = vpack.c.b16 %v1393, %v1381
    %v1982 = vpack.c.b16 %v1394, %v1382
    %v1983 = vpack.c.b16 %v1395, %v1383
    %v1984 = vpack.c.b16 %v1396, %v1384
    %v1985 = vpack.c.b16 %v1397, %v1385
    %v1986 = vpack.c.b16 %v1398, %v1386
    %v1987 = vpack.c.b16 %v1399, %v1387
    %v1988 = vpack.c.b16 %v1412, %v1400
    %v1989 = vpack.c.b16 %v1413, %v1401
    %v1990 = vpack.c.b16 %v1414, %v1402
    %v1991 = vpack.c.b16 %v1415, %v1403
    %v1992 = vpack.c.b16 %v1416, %v1404
    %v1993 = vpack.c.b16 %v1417, %v1405
    %v1994 = vpack.c.b16 %v1418, %v1406
    %v1995 = vpack.c.b16 %v1419, %v1407
    %v1996 = vpack.c.b16 %v1420, %v1408
    %v1997 = vpack.c.b16 %v1421, %v1409
    %v1998 = vpack.c.b16 %v1422, %v1410
    %v1999 = vpack.c.b16 %v1423, %v1411
    %v2000 = vpack.c.b16 %v1436, %v1424
    %v2001 = vpack.c.b16 %v1437, %v1425
    %v2002 = vpack.c.b16 %v1438, %v1426
    %v2003 = vpack.c.b16 %v1439, %v1427
    %v2004 = vpack.c.b16 %v1440, %v1428
    %v2005 = vpack.c.b16 %v1441, %v1429
    %v2006 = vpack.c.b16 %v1442, %v1430
    %v2007 = vpack.c.b16 %v1443, %v1431
    %v2008 = vpack.c.b16 %v1444, %v1432
    %v2009 = vpack.c.b16 %v1445, %v1433
    %v2010 = vpack.c.b16 %v1446, %v1434
    %v2011 = vpack.c.b16 %v1447, %v1435
    %v2012 = vpack.c.b16 %v1460, %v1448
    %v2013 = vpack.c.b16 %v1461, %v1449
    %v2014 = vpack.c.b16 %v1462, %v1450
    %v2015 = vpack.c.b16 %v1463, %v1451
    %v2016 = vpack.c.b16 %v1464, %v1452
    %v2017 = vpack.c.b16 %v1465, %v1453
    %v2018 = vpack.c.b16 %v1466, %v1454
    %v2019 = vpack.c.b16 %v1467, %v1455
    %v2020 = vpack.c.b16 %v1468, %v1456
    %v2021 = vpack.c.b16 %v1469, %v1457
    %v2022 = vpack.c.b16 %v1470, %v1458
    %v2023 = vpack.c.b16 %v1471, %v1459
    %v2024 = vpack.c.b16 %v1484, %v1472
    %v2025 = vpack.c.b16 %v1485, %v1473
    %v2026 = vpack.c.b16 %v1486, %v1474
    %v2027 = vpack.c.b16 %v1487, %v1475
    %v2028 = vpack.c.b16 %v1488, %v1476
    %v2029 = vpack.c.b16 %v1489, %v1477
    %v2030 = vpack.c.b16 %v1490, %v1478
    %v2031 = vpack.c.b16 %v1491, %v1479
    %v2032 = vpack.c.b16 %v1492, %v1480
    %v2033 = vpack.c.b16 %v1493, %v1481
    %v2034 = vpack.c.b16 %v1494, %v1482
    %v2035 = vpack.c.b16 %v1495, %v1483
    %v2036 = vpack.c.b16 %v1508, %v1496
    %v2037 = vpack.c.b16 %v1509, %v1497
    %v2038 = vpack.c.b16 %v1510, %v1498
    %v2039 = vpack.c.b16 %v1511, %v1499
    %v2040 = vpack.c.b16 %v1512, %v1500
    %v2041 = vpack.c.b16 %v1513, %v1501
    %v2042 = vpack.c.b16 %v1514, %v1502
    %v2043 = vpack.c.b16 %v1515, %v1503
    %v2044 = vpack.c.b16 %v1516, %v1504
    %v2045 = vpack.c.b16 %v1517, %v1505
    %v2046 = vpack.c.b16 %v1518, %v1506
    %v2047 = vpack.c.b16 %v1519, %v1507
    %v2048 = vpack.c.b16 %v1532, %v1520
    %v2049 = vpack.c.b16 %v1533, %v1521
    %v2050 = vpack.c.b16 %v1534, %v1522
    %v2051 = vpack.c.b16 %v1535, %v1523
    %v2052 = vpack.c.b16 %v1536, %v1524
    %v2053 = vpack.c.b16 %v1537, %v1525
    %v2054 = vpack.c.b16 %v1538, %v1526
    %v2055 = vpack.c.b16 %v1539, %v1527
    %v2056 = vpack.c.b16 %v1540, %v1528
    %v2057 = vpack.c.b16 %v1541, %v1529
    %v2058 = vpack.c.b16 %v1542, %v1530
    %v2059 = vpack.c.b16 %v1543, %v1531
    %v2060 = vpack.c.b16 %v1556, %v1544
    %v2061 = vpack.c.b16 %v1557, %v1545
    %v2062 = vpack.c.b16 %v1558, %v1546
    %v2063 = vpack.c.b16 %v1559, %v1547
    %v2064 = vpack.c.b16 %v1560, %v1548
    %v2065 = vpack.c.b16 %v1561, %v1549
    %v2066 = vpack.c.b16 %v1562, %v1550
    %v2067 = vpack.c.b16 %v1563, %v1551
    %v2068 = vpack.c.b16 %v1564, %v1552
    %v2069 = vpack.c.b16 %v1565, %v1553
    %v2070 = vpack.c.b16 %v1566, %v1554
    %v2071 = vpack.c.b16 %v1567, %v1555
    %v2072 = vpack.c.b16 %v1580, %v1568
    %v2073 = vpack.c.b16 %v1581, %v1569
    %v2074 = vpack.c.b16 %v1582, %v1570
    %v2075 = vpack.c.b16 %v1583, %v1571
    %v2076 = vpack.c.b16 %v1584, %v1572
    %v2077 = vpack.c.b16 %v1585, %v1573
    %v2078 = vpack.c.b16 %v1586, %v1574
    %v2079 = vpack.c.b16 %v1587, %v1575
    %v2080 = vpack.c.b16 %v1588, %v1576
    %v2081 = vpack.c.b16 %v1589, %v1577
    %v2082 = vpack.c.b16 %v1590, %v1578
    %v2083 = vpack.c.b16 %v1591, %v1579
    %v2084 = vpack.c.b16 %v1604, %v1592
    %v2085 = vpack.c.b16 %v1605, %v1593
    %v2086 = vpack.c.b16 %v1606, %v1594
    %v2087 = vpack.c.b16 %v1607, %v1595
    %v2088 = vpack.c.b16 %v1608, %v1596
    %v2089 = vpack.c.b16 %v1609, %v1597
    %v2090 = vpack.c.b16 %v1610, %v1598
    %v2091 = vpack.c.b16 %v1611, %v1599
    %v2092 = vpack.c.b16 %v1612, %v1600
    %v2093 = vpack.c.b16 %v1613, %v1601
    %v2094 = vpack.c.b16 %v1614, %v1602
    %v2095 = vpack.c.b16 %v1615, %v1603
    %v2096 = vpack.c.b16 %v1628, %v1616
    %v2097 = vpack.c.b16 %v1629, %v1617
    %v2098 = vpack.c.b16 %v1630, %v1618
    %v2099 = vpack.c.b16 %v1631, %v1619
    %v2100 = vpack.c.b16 %v1632, %v1620
    %v2101 = vpack.c.b16 %v1633, %v1621
    %v2102 = vpack.c.b16 %v1634, %v1622
    %v2103 = vpack.c.b16 %v1635, %v1623
    %v2104 = vpack.c.b16 %v1636, %v1624
    %v2105 = vpack.c.b16 %v1637, %v1625
    %v2106 = vpack.c.b16 %v1638, %v1626
    %v2107 = vpack.c.b16 %v1639, %v1627
    %v2108 = vpack.c.b16 %v1652, %v1640
    %v2109 = vpack.c.b16 %v1653, %v1641
    %v2110 = vpack.c.b16 %v1654, %v1642
    %v2111 = vpack.c.b16 %v1655, %v1643
    %v2112 = vpack.c.b16 %v1656, %v1644
    %v2113 = vpack.c.b16 %v1657, %v1645
    %v2114 = vpack.c.b16 %v1658, %v1646
    %v2115 = vpack.c.b16 %v1659, %v1647
    %v2116 = vpack.c.b16 %v1660, %v1648
    %v2117 = vpack.c.b16 %v1661, %v1649
    %v2118 = vpack.c.b16 %v1662, %v1650
    %v2119 = vpack.c.b16 %v1663, %v1651
    %v2120 = vpack.c.b16 %v1676, %v1664
    %v2121 = vpack.c.b16 %v1677, %v1665
    %v2122 = vpack.c.b16 %v1678, %v1666
    %v2123 = vpack.c.b16 %v1679, %v1667
    %v2124 = vpack.c.b16 %v1680, %v1668
    %v2125 = vpack.c.b16 %v1681, %v1669
    %v2126 = vpack.c.b16 %v1682, %v1670
    %v2127 = vpack.c.b16 %v1683, %v1671
    %v2128 = vpack.c.b16 %v1684, %v1672
    %v2129 = vpack.c.b16 %v1685, %v1673
    %v2130 = vpack.c.b16 %v1686, %v1674
    %v2131 = vpack.c.b16 %v1687, %v1675
    %v2132 = vpack.c.b16 %v1700, %v1688
    %v2133 = vpack.c.b16 %v1701, %v1689
    %v2134 = vpack.c.b16 %v1702, %v1690
    %v2135 = vpack.c.b16 %v1703, %v1691
    %v2136 = vpack.c.b16 %v1704, %v1692
    %v2137 = vpack.c.b16 %v1705, %v1693
    %v2138 = vpack.c.b16 %v1706, %v1694
    %v2139 = vpack.c.b16 %v1707, %v1695
    %v2140 = vpack.c.b16 %v1708, %v1696
    %v2141 = vpack.c.b16 %v1709, %v1697
    %v2142 = vpack.c.b16 %v1710, %v1698
    %v2143 = vpack.c.b16 %v1711, %v1699
    %v2144 = vpack.c.b16 %v1724, %v1712
    %v2145 = vpack.c.b16 %v1725, %v1713
    %v2146 = vpack.c.b16 %v1726, %v1714
    %v2147 = vpack.c.b16 %v1727, %v1715
    %v2148 = vpack.c.b16 %v1728, %v1716
    %v2149 = vpack.c.b16 %v1729, %v1717
    %v2150 = vpack.c.b16 %v1730, %v1718
    %v2151 = vpack.c.b16 %v1731, %v1719
    %v2152 = vpack.c.b16 %v1732, %v1720
    %v2153 = vpack.c.b16 %v1733, %v1721
    %v2154 = vpack.c.b16 %v1734, %v1722
    %v2155 = vpack.c.b16 %v1735, %v1723
    %v2156 = vpack.c.b16 %v1748, %v1736
    %v2157 = vpack.c.b16 %v1749, %v1737
    %v2158 = vpack.c.b16 %v1750, %v1738
    %v2159 = vpack.c.b16 %v1751, %v1739
    %v2160 = vpack.c.b16 %v1752, %v1740
    %v2161 = vpack.c.b16 %v1753, %v1741
    %v2162 = vpack.c.b16 %v1754, %v1742
    %v2163 = vpack.c.b16 %v1755, %v1743
    %v2164 = vpack.c.b16 %v1756, %v1744
    %v2165 = vpack.c.b16 %v1757, %v1745
    %v2166 = vpack.c.b16 %v1758, %v1746
    %v2167 = vpack.c.b16 %v1759, %v1747
    %v2168 = vpack.c.b16 %v1772, %v1760
    %v2169 = vpack.c.b16 %v1773, %v1761
    %v2170 = vpack.c.b16 %v1774, %v1762
    %v2171 = vpack.c.b16 %v1775, %v1763
    %v2172 = vpack.c.b16 %v1776, %v1764
    %v2173 = vpack.c.b16 %v1777, %v1765
    %v2174 = vpack.c.b16 %v1778, %v1766
    %v2175 = vpack.c.b16 %v1779, %v1767
    %v2176 = vpack.c.b16 %v1780, %v1768
    %v2177 = vpack.c.b16 %v1781, %v1769
    %v2178 = vpack.c.b16 %v1782, %v1770
    %v2179 = vpack.c.b16 %v1783, %v1771
    %v2180 = vpack.c.b16 %v1796, %v1784
    %v2181 = vpack.c.b16 %v1797, %v1785
    %v2182 = vpack.c.b16 %v1798, %v1786
    %v2183 = vpack.c.b16 %v1799, %v1787
    %v2184 = vpack.c.b16 %v1800, %v1788
    %v2185 = vpack.c.b16 %v1801, %v1789
    %v2186 = vpack.c.b16 %v1802, %v1790
    %v2187 = vpack.c.b16 %v1803, %v1791
    %v2188 = vpack.c.b16 %v1804, %v1792
    %v2189 = vpack.c.b16 %v1805, %v1793
    %v2190 = vpack.c.b16 %v1806, %v1794
    %v2191 = vpack.c.b16 %v1807, %v1795
    %2576 = vmatprep.subr.bf16.mxu0 %v1809
    %2577 = vmatpush1.bf16.msra.mxu0 %v1808
    %2578 = vmatprep.subr.bf16.mxu0 %v1821
    %2579 = vmatpush1.bf16.msra.mxu0 %v1820
    %2580 = vmatprep.subr.bf16.mxu0 %v1833
    %2581 = vmatpush1.bf16.msra.mxu0 %v1832
    %2582 = vmatprep.subr.bf16.mxu0 %v1845
    %2583 = vmatpush1.bf16.msra.mxu0 %v1844
    %2584 = vmatprep.subr.bf16.mxu0 %v1857
    %2585 = vmatpush1.bf16.msra.mxu0 %v1856
    %2586 = vmatprep.subr.bf16.mxu0 %v1869
    %2587 = vmatpush1.bf16.msra.mxu0 %v1868
    %2588 = vmatprep.subr.bf16.mxu0 %v1881
    %2589 = vmatpush1.bf16.msra.mxu0 %v1880
    %2590 = vmatprep.subr.bf16.mxu0 %v1893
    %2591 = vmatpush1.bf16.msra.mxu0 %v1892
    %2592 = vmatprep.subr.bf16.mxu0 %v1905
    %2593 = vmatpush1.bf16.msra.mxu0 %v1904
    %2594 = vmatprep.subr.bf16.mxu0 %v1917
    %2595 = vmatpush1.bf16.msra.mxu0 %v1916
    %2596 = vmatprep.subr.bf16.mxu0 %v1929
    %2597 = vmatpush1.bf16.msra.mxu0 %v1928
    %2598 = vmatprep.subr.bf16.mxu0 %v1941
    %2599 = vmatpush1.bf16.msra.mxu0 %v1940
    %2600 = vmatprep.subr.bf16.mxu0 %v1953
    %2601 = vmatpush1.bf16.msra.mxu0 %v1952
    %2602 = vmatprep.subr.bf16.mxu0 %v1965
    %2603 = vmatpush1.bf16.msra.mxu0 %v1964
    %2604 = vmatprep.subr.bf16.mxu0 %v1977
    %2605 = vmatpush1.bf16.msra.mxu0 %v1976
    %2606 = vmatprep.subr.bf16.mxu0 %v1989
    %2607 = vmatpush1.bf16.msra.mxu0 %v1988
    %2608 = vmatprep.mubr.bf16.mxu0 %v205
    %2609 = vmatmul.mubr.bf16.gmra.mrb[0].mxu0 %v204
    %v2610 = vpop.f32.mrb[0].mxu0
    %v2611 = vadd.f32 %v599, %v2610
    %v2612 = vpop.f32.mrb[0].mxu0
    %v2613 = vadd.f32 %v603, %v2612
    %v2614 = vpop.f32.mrb[0].mxu0
    %v2615 = vadd.f32 %v599, %v2614
    %v2616 = vpop.f32.mrb[0].mxu0
    %v2617 = vadd.f32 %v603, %v2616
    %2618 = vdwg.mxu0
    %2619 = vmatprep.subr.bf16.mxu0 %v2001
    %2620 = vmatpush1.bf16.msra.mxu0 %v2000
    %2621 = vmatprep.subr.bf16.mxu0 %v2013
    %2622 = vmatpush1.bf16.msra.mxu0 %v2012
    %2623 = vmatprep.subr.bf16.mxu0 %v2025
    %2624 = vmatpush1.bf16.msra.mxu0 %v2024
    %2625 = vmatprep.subr.bf16.mxu0 %v2037
    %2626 = vmatpush1.bf16.msra.mxu0 %v2036
    %2627 = vmatprep.subr.bf16.mxu0 %v2049
    %2628 = vmatpush1.bf16.msra.mxu0 %v2048
    %2629 = vmatprep.subr.bf16.mxu0 %v2061
    %2630 = vmatpush1.bf16.msra.mxu0 %v2060
    %2631 = vmatprep.subr.bf16.mxu0 %v2073
    %2632 = vmatpush1.bf16.msra.mxu0 %v2072
    %2633 = vmatprep.subr.bf16.mxu0 %v2085
    %2634 = vmatpush1.bf16.msra.mxu0 %v2084
    %2635 = vmatprep.subr.bf16.mxu0 %v2097
    %2636 = vmatpush1.bf16.msra.mxu0 %v2096
    %2637 = vmatprep.subr.bf16.mxu0 %v2109
    %2638 = vmatpush1.bf16.msra.mxu0 %v2108
    %2639 = vmatprep.subr.bf16.mxu0 %v2121
    %2640 = vmatpush1.bf16.msra.mxu0 %v2120
    %2641 = vmatprep.subr.bf16.mxu0 %v2133
    %2642 = vmatpush1.bf16.msra.mxu0 %v2132
    %2643 = vmatprep.subr.bf16.mxu0 %v2145
    %2644 = vmatpush1.bf16.msra.mxu0 %v2144
    %2645 = vmatprep.subr.bf16.mxu0 %v2157
    %2646 = vmatpush1.bf16.msra.mxu0 %v2156
    %2647 = vmatprep.subr.bf16.mxu0 %v2169
    %2648 = vmatpush1.bf16.msra.mxu0 %v2168
    %2649 = vmatprep.subr.bf16.mxu0 %v2181
    %2650 = vmatpush1.bf16.msra.mxu0 %v2180
    %2651 = vmatprep.mubr.bf16.mxu0 %v207
    %2652 = vmatmul.mubr.bf16.gmra.mrb[0].mxu0 %v206
    %v2653 = vpop.f32.mrb[0].mxu0
    %v2654 = vadd.f32 %v2611, %v2653
    %v2655 = vpop.f32.mrb[0].mxu0
    %v2656 = vadd.f32 %v2613, %v2655
    %v2657 = vpop.f32.mrb[0].mxu0
    %v2658 = vadd.f32 %v2615, %v2657
    %v2659 = vpop.f32.mrb[0].mxu0
    %v2660 = vadd.f32 %v2617, %v2659
    %2661 = vdwg.mxu0
    %2662 = vmatprep.subr.bf16.mxu0 %v1811
    %2663 = vmatpush1.bf16.msra.mxu0 %v1810
    %2664 = vmatprep.subr.bf16.mxu0 %v1823
    %2665 = vmatpush1.bf16.msra.mxu0 %v1822
    %2666 = vmatprep.subr.bf16.mxu0 %v1835
    %2667 = vmatpush1.bf16.msra.mxu0 %v1834
    %2668 = vmatprep.subr.bf16.mxu0 %v1847
    %2669 = vmatpush1.bf16.msra.mxu0 %v1846
    %2670 = vmatprep.subr.bf16.mxu0 %v1859
    %2671 = vmatpush1.bf16.msra.mxu0 %v1858
    %2672 = vmatprep.subr.bf16.mxu0 %v1871
    %2673 = vmatpush1.bf16.msra.mxu0 %v1870
    %2674 = vmatprep.subr.bf16.mxu0 %v1883
    %2675 = vmatpush1.bf16.msra.mxu0 %v1882
    %2676 = vmatprep.subr.bf16.mxu0 %v1895
    %2677 = vmatpush1.bf16.msra.mxu0 %v1894
    %2678 = vmatprep.subr.bf16.mxu0 %v1907
    %2679 = vmatpush1.bf16.msra.mxu0 %v1906
    %2680 = vmatprep.subr.bf16.mxu0 %v1919
    %2681 = vmatpush1.bf16.msra.mxu0 %v1918
    %2682 = vmatprep.subr.bf16.mxu0 %v1931
    %2683 = vmatpush1.bf16.msra.mxu0 %v1930
    %2684 = vmatprep.subr.bf16.mxu0 %v1943
    %2685 = vmatpush1.bf16.msra.mxu0 %v1942
    %2686 = vmatprep.subr.bf16.mxu0 %v1955
    %2687 = vmatpush1.bf16.msra.mxu0 %v1954
    %2688 = vmatprep.subr.bf16.mxu0 %v1967
    %2689 = vmatpush1.bf16.msra.mxu0 %v1966
    %2690 = vmatprep.subr.bf16.mxu0 %v1979
    %2691 = vmatpush1.bf16.msra.mxu0 %v1978
    %2692 = vmatprep.subr.bf16.mxu0 %v1991
    %2693 = vmatpush1.bf16.msra.mxu0 %v1990
    %2694 = vmatprep.mubr.bf16.mxu0 %v205
    %2695 = vmatmul.mubr.bf16.gmra.mrb[0].mxu0 %v204
    %v2696 = vpop.f32.mrb[0].mxu0
    %v2697 = vadd.f32 %v607, %v2696
    %v2698 = vpop.f32.mrb[0].mxu0
    %v2699 = vadd.f32 %v611, %v2698
    %v2700 = vpop.f32.mrb[0].mxu0
    %v2701 = vadd.f32 %v607, %v2700
    %v2702 = vpop.f32.mrb[0].mxu0
    %v2703 = vadd.f32 %v611, %v2702
    %2704 = vdwg.mxu0
    %2705 = vmatprep.subr.bf16.mxu0 %v2003
    %2706 = vmatpush1.bf16.msra.mxu0 %v2002
    %2707 = vmatprep.subr.bf16.mxu0 %v2015
    %2708 = vmatpush1.bf16.msra.mxu0 %v2014
    %2709 = vmatprep.subr.bf16.mxu0 %v2027
    %2710 = vmatpush1.bf16.msra.mxu0 %v2026
    %2711 = vmatprep.subr.bf16.mxu0 %v2039
    %2712 = vmatpush1.bf16.msra.mxu0 %v2038
    %2713 = vmatprep.subr.bf16.mxu0 %v2051
    %2714 = vmatpush1.bf16.msra.mxu0 %v2050
    %2715 = vmatprep.subr.bf16.mxu0 %v2063
    %2716 = vmatpush1.bf16.msra.mxu0 %v2062
    %2717 = vmatprep.subr.bf16.mxu0 %v2075
    %2718 = vmatpush1.bf16.msra.mxu0 %v2074
    %2719 = vmatprep.subr.bf16.mxu0 %v2087
    %2720 = vmatpush1.bf16.msra.mxu0 %v2086
    %2721 = vmatprep.subr.bf16.mxu0 %v2099
    %2722 = vmatpush1.bf16.msra.mxu0 %v2098
    %2723 = vmatprep.subr.bf16.mxu0 %v2111
    %2724 = vmatpush1.bf16.msra.mxu0 %v2110
    %2725 = vmatprep.subr.bf16.mxu0 %v2123
    %2726 = vmatpush1.bf16.msra.mxu0 %v2122
    %2727 = vmatprep.subr.bf16.mxu0 %v2135
    %2728 = vmatpush1.bf16.msra.mxu0 %v2134
    %2729 = vmatprep.subr.bf16.mxu0 %v2147
    %2730 = vmatpush1.bf16.msra.mxu0 %v2146
    %2731 = vmatprep.subr.bf16.mxu0 %v2159
    %2732 = vmatpush1.bf16.msra.mxu0 %v2158
    %2733 = vmatprep.subr.bf16.mxu0 %v2171
    %2734 = vmatpush1.bf16.msra.mxu0 %v2170
    %2735 = vmatprep.subr.bf16.mxu0 %v2183
    %2736 = vmatpush1.bf16.msra.mxu0 %v2182
    %2737 = vmatprep.mubr.bf16.mxu0 %v207
    %2738 = vmatmul.mubr.bf16.gmra.mrb[0].mxu0 %v206
    %v2739 = vpop.f32.mrb[0].mxu0
    %v2740 = vadd.f32 %v2697, %v2739
    %v2741 = vpop.f32.mrb[0].mxu0
    %v2742 = vadd.f32 %v2699, %v2741
    %v2743 = vpop.f32.mrb[0].mxu0
    %v2744 = vadd.f32 %v2701, %v2743
    %v2745 = vpop.f32.mrb[0].mxu0
    %v2746 = vadd.f32 %v2703, %v2745
    %2747 = vdwg.mxu0
    %2748 = vmatprep.subr.bf16.mxu0 %v1813
    %2749 = vmatpush1.bf16.msra.mxu0 %v1812
    %2750 = vmatprep.subr.bf16.mxu0 %v1825
    %2751 = vmatpush1.bf16.msra.mxu0 %v1824
    %2752 = vmatprep.subr.bf16.mxu0 %v1837
    %2753 = vmatpush1.bf16.msra.mxu0 %v1836
    %2754 = vmatprep.subr.bf16.mxu0 %v1849
    %2755 = vmatpush1.bf16.msra.mxu0 %v1848
    %2756 = vmatprep.subr.bf16.mxu0 %v1861
    %2757 = vmatpush1.bf16.msra.mxu0 %v1860
    %2758 = vmatprep.subr.bf16.mxu0 %v1873
    %2759 = vmatpush1.bf16.msra.mxu0 %v1872
    %2760 = vmatprep.subr.bf16.mxu0 %v1885
    %2761 = vmatpush1.bf16.msra.mxu0 %v1884
    %2762 = vmatprep.subr.bf16.mxu0 %v1897
    %2763 = vmatpush1.bf16.msra.mxu0 %v1896
    %2764 = vmatprep.subr.bf16.mxu0 %v1909
    %2765 = vmatpush1.bf16.msra.mxu0 %v1908
    %2766 = vmatprep.subr.bf16.mxu0 %v1921
    %2767 = vmatpush1.bf16.msra.mxu0 %v1920
    %2768 = vmatprep.subr.bf16.mxu0 %v1933
    %2769 = vmatpush1.bf16.msra.mxu0 %v1932
    %2770 = vmatprep.subr.bf16.mxu0 %v1945
    %2771 = vmatpush1.bf16.msra.mxu0 %v1944
    %2772 = vmatprep.subr.bf16.mxu0 %v1957
    %2773 = vmatpush1.bf16.msra.mxu0 %v1956
    %2774 = vmatprep.subr.bf16.mxu0 %v1969
    %2775 = vmatpush1.bf16.msra.mxu0 %v1968
    %2776 = vmatprep.subr.bf16.mxu0 %v1981
    %2777 = vmatpush1.bf16.msra.mxu0 %v1980
    %2778 = vmatprep.subr.bf16.mxu0 %v1993
    %2779 = vmatpush1.bf16.msra.mxu0 %v1992
    %2780 = vmatprep.mubr.bf16.mxu0 %v205
    %2781 = vmatmul.mubr.bf16.gmra.mrb[0].mxu0 %v204
    %v2782 = vpop.f32.mrb[0].mxu0
    %v2783 = vadd.f32 %v615, %v2782
    %v2784 = vpop.f32.mrb[0].mxu0
    %v2785 = vadd.f32 %v619, %v2784
    %v2786 = vpop.f32.mrb[0].mxu0
    %v2787 = vadd.f32 %v615, %v2786
    %v2788 = vpop.f32.mrb[0].mxu0
    %v2789 = vadd.f32 %v619, %v2788
    %2790 = vdwg.mxu0
    %2791 = vmatprep.subr.bf16.mxu0 %v2005
    %2792 = vmatpush1.bf16.msra.mxu0 %v2004
    %2793 = vmatprep.subr.bf16.mxu0 %v2017
    %2794 = vmatpush1.bf16.msra.mxu0 %v2016
    %2795 = vmatprep.subr.bf16.mxu0 %v2029
    %2796 = vmatpush1.bf16.msra.mxu0 %v2028
    %2797 = vmatprep.subr.bf16.mxu0 %v2041
    %2798 = vmatpush1.bf16.msra.mxu0 %v2040
    %2799 = vmatprep.subr.bf16.mxu0 %v2053
    %2800 = vmatpush1.bf16.msra.mxu0 %v2052
    %2801 = vmatprep.subr.bf16.mxu0 %v2065
    %2802 = vmatpush1.bf16.msra.mxu0 %v2064
    %2803 = vmatprep.subr.bf16.mxu0 %v2077
    %2804 = vmatpush1.bf16.msra.mxu0 %v2076
    %2805 = vmatprep.subr.bf16.mxu0 %v2089
    %2806 = vmatpush1.bf16.msra.mxu0 %v2088
    %2807 = vmatprep.subr.bf16.mxu0 %v2101
    %2808 = vmatpush1.bf16.msra.mxu0 %v2100
    %2809 = vmatprep.subr.bf16.mxu0 %v2113
    %2810 = vmatpush1.bf16.msra.mxu0 %v2112
    %2811 = vmatprep.subr.bf16.mxu0 %v2125
    %2812 = vmatpush1.bf16.msra.mxu0 %v2124
    %2813 = vmatprep.subr.bf16.mxu0 %v2137
    %2814 = vmatpush1.bf16.msra.mxu0 %v2136
    %2815 = vmatprep.subr.bf16.mxu0 %v2149
    %2816 = vmatpush1.bf16.msra.mxu0 %v2148
    %2817 = vmatprep.subr.bf16.mxu0 %v2161
    %2818 = vmatpush1.bf16.msra.mxu0 %v2160
    %2819 = vmatprep.subr.bf16.mxu0 %v2173
    %2820 = vmatpush1.bf16.msra.mxu0 %v2172
    %2821 = vmatprep.subr.bf16.mxu0 %v2185
    %2822 = vmatpush1.bf16.msra.mxu0 %v2184
    %2823 = vmatprep.mubr.bf16.mxu0 %v207
    %2824 = vmatmul.mubr.bf16.gmra.mrb[0].mxu0 %v206
    %v2825 = vpop.f32.mrb[0].mxu0
    %v2826 = vadd.f32 %v2783, %v2825
    %v2827 = vpop.f32.mrb[0].mxu0
    %v2828 = vadd.f32 %v2785, %v2827
    %v2829 = vpop.f32.mrb[0].mxu0
    %v2830 = vadd.f32 %v2787, %v2829
    %v2831 = vpop.f32.mrb[0].mxu0
    %v2832 = vadd.f32 %v2789, %v2831
    %2833 = vdwg.mxu0
    %2834 = vmatprep.subr.bf16.mxu0 %v1815
    %2835 = vmatpush1.bf16.msra.mxu0 %v1814
    %2836 = vmatprep.subr.bf16.mxu0 %v1827
    %2837 = vmatpush1.bf16.msra.mxu0 %v1826
    %2838 = vmatprep.subr.bf16.mxu0 %v1839
    %2839 = vmatpush1.bf16.msra.mxu0 %v1838
    %2840 = vmatprep.subr.bf16.mxu0 %v1851
    %2841 = vmatpush1.bf16.msra.mxu0 %v1850
    %2842 = vmatprep.subr.bf16.mxu0 %v1863
    %2843 = vmatpush1.bf16.msra.mxu0 %v1862
    %2844 = vmatprep.subr.bf16.mxu0 %v1875
    %2845 = vmatpush1.bf16.msra.mxu0 %v1874
    %2846 = vmatprep.subr.bf16.mxu0 %v1887
    %2847 = vmatpush1.bf16.msra.mxu0 %v1886
    %2848 = vmatprep.subr.bf16.mxu0 %v1899
    %2849 = vmatpush1.bf16.msra.mxu0 %v1898
    %2850 = vmatprep.subr.bf16.mxu0 %v1911
    %2851 = vmatpush1.bf16.msra.mxu0 %v1910
    %2852 = vmatprep.subr.bf16.mxu0 %v1923
    %2853 = vmatpush1.bf16.msra.mxu0 %v1922
    %2854 = vmatprep.subr.bf16.mxu0 %v1935
    %2855 = vmatpush1.bf16.msra.mxu0 %v1934
    %2856 = vmatprep.subr.bf16.mxu0 %v1947
    %2857 = vmatpush1.bf16.msra.mxu0 %v1946
    %2858 = vmatprep.subr.bf16.mxu0 %v1959
    %2859 = vmatpush1.bf16.msra.mxu0 %v1958
    %2860 = vmatprep.subr.bf16.mxu0 %v1971
    %2861 = vmatpush1.bf16.msra.mxu0 %v1970
    %2862 = vmatprep.subr.bf16.mxu0 %v1983
    %2863 = vmatpush1.bf16.msra.mxu0 %v1982
    %2864 = vmatprep.subr.bf16.mxu0 %v1995
    %2865 = vmatpush1.bf16.msra.mxu0 %v1994
    %2866 = vmatprep.mubr.bf16.mxu0 %v205
    %2867 = vmatmul.mubr.bf16.gmra.mrb[0].mxu0 %v204
    %v2868 = vpop.f32.mrb[0].mxu0
    %v2869 = vadd.f32 %v623, %v2868
    %v2870 = vpop.f32.mrb[0].mxu0
    %v2871 = vadd.f32 %v627, %v2870
    %v2872 = vpop.f32.mrb[0].mxu0
    %v2873 = vadd.f32 %v623, %v2872
    %v2874 = vpop.f32.mrb[0].mxu0
    %v2875 = vadd.f32 %v627, %v2874
    %2876 = vdwg.mxu0
    %2877 = vmatprep.subr.bf16.mxu0 %v2007
    %2878 = vmatpush1.bf16.msra.mxu0 %v2006
    %2879 = vmatprep.subr.bf16.mxu0 %v2019
    %2880 = vmatpush1.bf16.msra.mxu0 %v2018
    %2881 = vmatprep.subr.bf16.mxu0 %v2031
    %2882 = vmatpush1.bf16.msra.mxu0 %v2030
    %2883 = vmatprep.subr.bf16.mxu0 %v2043
    %2884 = vmatpush1.bf16.msra.mxu0 %v2042
    %2885 = vmatprep.subr.bf16.mxu0 %v2055
    %2886 = vmatpush1.bf16.msra.mxu0 %v2054
    %2887 = vmatprep.subr.bf16.mxu0 %v2067
    %2888 = vmatpush1.bf16.msra.mxu0 %v2066
    %2889 = vmatprep.subr.bf16.mxu0 %v2079
    %2890 = vmatpush1.bf16.msra.mxu0 %v2078
    %2891 = vmatprep.subr.bf16.mxu0 %v2091
    %2892 = vmatpush1.bf16.msra.mxu0 %v2090
    %2893 = vmatprep.subr.bf16.mxu0 %v2103
    %2894 = vmatpush1.bf16.msra.mxu0 %v2102
    %2895 = vmatprep.subr.bf16.mxu0 %v2115
    %2896 = vmatpush1.bf16.msra.mxu0 %v2114
    %2897 = vmatprep.subr.bf16.mxu0 %v2127
    %2898 = vmatpush1.bf16.msra.mxu0 %v2126
    %2899 = vmatprep.subr.bf16.mxu0 %v2139
    %2900 = vmatpush1.bf16.msra.mxu0 %v2138
    %2901 = vmatprep.subr.bf16.mxu0 %v2151
    %2902 = vmatpush1.bf16.msra.mxu0 %v2150
    %2903 = vmatprep.subr.bf16.mxu0 %v2163
    %2904 = vmatpush1.bf16.msra.mxu0 %v2162
    %2905 = vmatprep.subr.bf16.mxu0 %v2175
    %2906 = vmatpush1.bf16.msra.mxu0 %v2174
    %2907 = vmatprep.subr.bf16.mxu0 %v2187
    %2908 = vmatpush1.bf16.msra.mxu0 %v2186
    %2909 = vmatprep.mubr.bf16.mxu0 %v207
    %2910 = vmatmul.mubr.bf16.gmra.mrb[0].mxu0 %v206
    %v2911 = vpop.f32.mrb[0].mxu0
    %v2912 = vadd.f32 %v2869, %v2911
    %v2913 = vpop.f32.mrb[0].mxu0
    %v2914 = vadd.f32 %v2871, %v2913
    %v2915 = vpop.f32.mrb[0].mxu0
    %v2916 = vadd.f32 %v2873, %v2915
    %v2917 = vpop.f32.mrb[0].mxu0
    %v2918 = vadd.f32 %v2875, %v2917
    %2919 = vdwg.mxu0
    %2920 = vmatprep.subr.bf16.mxu0 %v1817
    %2921 = vmatpush1.bf16.msra.mxu0 %v1816
    %2922 = vmatprep.subr.bf16.mxu0 %v1829
    %2923 = vmatpush1.bf16.msra.mxu0 %v1828
    %2924 = vmatprep.subr.bf16.mxu0 %v1841
    %2925 = vmatpush1.bf16.msra.mxu0 %v1840
    %2926 = vmatprep.subr.bf16.mxu0 %v1853
    %2927 = vmatpush1.bf16.msra.mxu0 %v1852
    %2928 = vmatprep.subr.bf16.mxu0 %v1865
    %2929 = vmatpush1.bf16.msra.mxu0 %v1864
    %2930 = vmatprep.subr.bf16.mxu0 %v1877
    %2931 = vmatpush1.bf16.msra.mxu0 %v1876
    %2932 = vmatprep.subr.bf16.mxu0 %v1889
    %2933 = vmatpush1.bf16.msra.mxu0 %v1888
    %2934 = vmatprep.subr.bf16.mxu0 %v1901
    %2935 = vmatpush1.bf16.msra.mxu0 %v1900
    %2936 = vmatprep.subr.bf16.mxu0 %v1913
    %2937 = vmatpush1.bf16.msra.mxu0 %v1912
    %2938 = vmatprep.subr.bf16.mxu0 %v1925
    %2939 = vmatpush1.bf16.msra.mxu0 %v1924
    %2940 = vmatprep.subr.bf16.mxu0 %v1937
    %2941 = vmatpush1.bf16.msra.mxu0 %v1936
    %2942 = vmatprep.subr.bf16.mxu0 %v1949
    %2943 = vmatpush1.bf16.msra.mxu0 %v1948
    %2944 = vmatprep.subr.bf16.mxu0 %v1961
    %2945 = vmatpush1.bf16.msra.mxu0 %v1960
    %2946 = vmatprep.subr.bf16.mxu0 %v1973
    %2947 = vmatpush1.bf16.msra.mxu0 %v1972
    %2948 = vmatprep.subr.bf16.mxu0 %v1985
    %2949 = vmatpush1.bf16.msra.mxu0 %v1984
    %2950 = vmatprep.subr.bf16.mxu0 %v1997
    %2951 = vmatpush1.bf16.msra.mxu0 %v1996
    %2952 = vmatprep.mubr.bf16.mxu0 %v205
    %2953 = vmatmul.mubr.bf16.gmra.mrb[0].mxu0 %v204
    %v2954 = vpop.f32.mrb[0].mxu0
    %v2955 = vadd.f32 %v631, %v2954
    %v2956 = vpop.f32.mrb[0].mxu0
    %v2957 = vadd.f32 %v635, %v2956
    %v2958 = vpop.f32.mrb[0].mxu0
    %v2959 = vadd.f32 %v631, %v2958
    %v2960 = vpop.f32.mrb[0].mxu0
    %v2961 = vadd.f32 %v635, %v2960
    %2962 = vdwg.mxu0
    %2963 = vmatprep.subr.bf16.mxu0 %v2009
    %2964 = vmatpush1.bf16.msra.mxu0 %v2008
    %2965 = vmatprep.subr.bf16.mxu0 %v2021
    %2966 = vmatpush1.bf16.msra.mxu0 %v2020
    %2967 = vmatprep.subr.bf16.mxu0 %v2033
    %2968 = vmatpush1.bf16.msra.mxu0 %v2032
    %2969 = vmatprep.subr.bf16.mxu0 %v2045
    %2970 = vmatpush1.bf16.msra.mxu0 %v2044
    %2971 = vmatprep.subr.bf16.mxu0 %v2057
    %2972 = vmatpush1.bf16.msra.mxu0 %v2056
    %2973 = vmatprep.subr.bf16.mxu0 %v2069
    %2974 = vmatpush1.bf16.msra.mxu0 %v2068
    %2975 = vmatprep.subr.bf16.mxu0 %v2081
    %2976 = vmatpush1.bf16.msra.mxu0 %v2080
    %2977 = vmatprep.subr.bf16.mxu0 %v2093
    %2978 = vmatpush1.bf16.msra.mxu0 %v2092
    %2979 = vmatprep.subr.bf16.mxu0 %v2105
    %2980 = vmatpush1.bf16.msra.mxu0 %v2104
    %2981 = vmatprep.subr.bf16.mxu0 %v2117
    %2982 = vmatpush1.bf16.msra.mxu0 %v2116
    %2983 = vmatprep.subr.bf16.mxu0 %v2129
    %2984 = vmatpush1.bf16.msra.mxu0 %v2128
    %2985 = vmatprep.subr.bf16.mxu0 %v2141
    %2986 = vmatpush1.bf16.msra.mxu0 %v2140
    %2987 = vmatprep.subr.bf16.mxu0 %v2153
    %2988 = vmatpush1.bf16.msra.mxu0 %v2152
    %2989 = vmatprep.subr.bf16.mxu0 %v2165
    %2990 = vmatpush1.bf16.msra.mxu0 %v2164
    %2991 = vmatprep.subr.bf16.mxu0 %v2177
    %2992 = vmatpush1.bf16.msra.mxu0 %v2176
    %2993 = vmatprep.subr.bf16.mxu0 %v2189
    %2994 = vmatpush1.bf16.msra.mxu0 %v2188
    %2995 = vmatprep.mubr.bf16.mxu0 %v207
    %2996 = vmatmul.mubr.bf16.gmra.mrb[0].mxu0 %v206
    %v2997 = vpop.f32.mrb[0].mxu0
    %v2998 = vadd.f32 %v2955, %v2997
    %v2999 = vpop.f32.mrb[0].mxu0
    %v3000 = vadd.f32 %v2957, %v2999
    %v3001 = vpop.f32.mrb[0].mxu0
    %v3002 = vadd.f32 %v2959, %v3001
    %v3003 = vpop.f32.mrb[0].mxu0
    %v3004 = vadd.f32 %v2961, %v3003
    %3005 = vdwg.mxu0
    %3006 = vmatprep.subr.bf16.mxu0 %v1819
    %3007 = vmatpush1.bf16.msra.mxu0 %v1818
    %3008 = vmatprep.subr.bf16.mxu0 %v1831
    %3009 = vmatpush1.bf16.msra.mxu0 %v1830
    %3010 = vmatprep.subr.bf16.mxu0 %v1843
    %3011 = vmatpush1.bf16.msra.mxu0 %v1842
    %3012 = vmatprep.subr.bf16.mxu0 %v1855
    %3013 = vmatpush1.bf16.msra.mxu0 %v1854
    %3014 = vmatprep.subr.bf16.mxu0 %v1867
    %3015 = vmatpush1.bf16.msra.mxu0 %v1866
    %3016 = vmatprep.subr.bf16.mxu0 %v1879
    %3017 = vmatpush1.bf16.msra.mxu0 %v1878
    %3018 = vmatprep.subr.bf16.mxu0 %v1891
    %3019 = vmatpush1.bf16.msra.mxu0 %v1890
    %3020 = vmatprep.subr.bf16.mxu0 %v1903
    %3021 = vmatpush1.bf16.msra.mxu0 %v1902
    %3022 = vmatprep.subr.bf16.mxu0 %v1915
    %3023 = vmatpush1.bf16.msra.mxu0 %v1914
    %3024 = vmatprep.subr.bf16.mxu0 %v1927
    %3025 = vmatpush1.bf16.msra.mxu0 %v1926
    %3026 = vmatprep.subr.bf16.mxu0 %v1939
    %3027 = vmatpush1.bf16.msra.mxu0 %v1938
    %3028 = vmatprep.subr.bf16.mxu0 %v1951
    %3029 = vmatpush1.bf16.msra.mxu0 %v1950
    %3030 = vmatprep.subr.bf16.mxu0 %v1963
    %3031 = vmatpush1.bf16.msra.mxu0 %v1962
    %3032 = vmatprep.subr.bf16.mxu0 %v1975
    %3033 = vmatpush1.bf16.msra.mxu0 %v1974
    %3034 = vmatprep.subr.bf16.mxu0 %v1987
    %3035 = vmatpush1.bf16.msra.mxu0 %v1986
    %3036 = vmatprep.subr.bf16.mxu0 %v1999
    %3037 = vmatpush1.bf16.msra.mxu0 %v1998
    %3038 = vmatprep.mubr.bf16.mxu0 %v205
    %3039 = vmatmul.mubr.bf16.gmra.mrb[0].mxu0 %v204
    %v3040 = vpop.f32.mrb[0].mxu0
    %v3041 = vadd.f32 %v639, %v3040
    %v3042 = vpop.f32.mrb[0].mxu0
    %v3043 = vadd.f32 %v643, %v3042
    %v3044 = vpop.f32.mrb[0].mxu0
    %v3045 = vadd.f32 %v639, %v3044
    %v3046 = vpop.f32.mrb[0].mxu0
    %v3047 = vadd.f32 %v643, %v3046
    %3048 = vdwg.mxu0
    %3049 = vmatprep.subr.bf16.mxu0 %v2011
    %3050 = vmatpush1.bf16.msra.mxu0 %v2010
    %3051 = vmatprep.subr.bf16.mxu0 %v2023
    %3052 = vmatpush1.bf16.msra.mxu0 %v2022
    %3053 = vmatprep.subr.bf16.mxu0 %v2035
    %3054 = vmatpush1.bf16.msra.mxu0 %v2034
    %3055 = vmatprep.subr.bf16.mxu0 %v2047
    %3056 = vmatpush1.bf16.msra.mxu0 %v2046
    %3057 = vmatprep.subr.bf16.mxu0 %v2059
    %3058 = vmatpush1.bf16.msra.mxu0 %v2058
    %3059 = vmatprep.subr.bf16.mxu0 %v2071
    %3060 = vmatpush1.bf16.msra.mxu0 %v2070
    %3061 = vmatprep.subr.bf16.mxu0 %v2083
    %3062 = vmatpush1.bf16.msra.mxu0 %v2082
    %3063 = vmatprep.subr.bf16.mxu0 %v2095
    %3064 = vmatpush1.bf16.msra.mxu0 %v2094
    %3065 = vmatprep.subr.bf16.mxu0 %v2107
    %3066 = vmatpush1.bf16.msra.mxu0 %v2106
    %3067 = vmatprep.subr.bf16.mxu0 %v2119
    %3068 = vmatpush1.bf16.msra.mxu0 %v2118
    %3069 = vmatprep.subr.bf16.mxu0 %v2131
    %3070 = vmatpush1.bf16.msra.mxu0 %v2130
    %3071 = vmatprep.subr.bf16.mxu0 %v2143
    %3072 = vmatpush1.bf16.msra.mxu0 %v2142
    %3073 = vmatprep.subr.bf16.mxu0 %v2155
    %3074 = vmatpush1.bf16.msra.mxu0 %v2154
    %3075 = vmatprep.subr.bf16.mxu0 %v2167
    %3076 = vmatpush1.bf16.msra.mxu0 %v2166
    %3077 = vmatprep.subr.bf16.mxu0 %v2179
    %3078 = vmatpush1.bf16.msra.mxu0 %v2178
    %3079 = vmatprep.subr.bf16.mxu0 %v2191
    %3080 = vmatpush1.bf16.msra.mxu0 %v2190
    %3081 = vmatprep.mubr.bf16.mxu0 %v207
    %3082 = vmatmul.mubr.bf16.gmra.mrb[0].mxu0 %v206
    %v3083 = vpop.f32.mrb[0].mxu0
    %v3084 = vadd.f32 %v3041, %v3083
    %v3085 = vpop.f32.mrb[0].mxu0
    %v3086 = vadd.f32 %v3043, %v3085
    %v3087 = vpop.f32.mrb[0].mxu0
    %v3088 = vadd.f32 %v3045, %v3087
    %v3089 = vpop.f32.mrb[0].mxu0
    %v3090 = vadd.f32 %v3047, %v3089
    %3091 = vdwg.mxu0
    %v3092 = vpack.c.bf16 %v2658, %v2654
    %v3093 = vpack.c.bf16 %v2660, %v2656
    %v3094 = vpack.c.bf16 %v2744, %v2740
    %v3095 = vpack.c.bf16 %v2746, %v2742
    %v3096 = vpack.c.bf16 %v2830, %v2826
    %v3097 = vpack.c.bf16 %v2832, %v2828
    %v3098 = vpack.c.bf16 %v2916, %v2912
    %v3099 = vpack.c.bf16 %v2918, %v2914
    %v3100 = vpack.c.bf16 %v3002, %v2998
    %v3101 = vpack.c.bf16 %v3004, %v3000
    %v3102 = vpack.c.bf16 %v3088, %v3084
    %v3103 = vpack.c.bf16 %v3090, %v3086
    %v3116 = vunpack.c.l.b16 %v3092
    %v3117 = vunpack.c.l.b16 %v3093
    %v3118 = vunpack.c.l.b16 %v3094
    %v3119 = vunpack.c.l.b16 %v3095
    %v3120 = vunpack.c.l.b16 %v3096
    %v3121 = vunpack.c.l.b16 %v3097
    %v3122 = vunpack.c.l.b16 %v3098
    %v3123 = vunpack.c.l.b16 %v3099
    %v3124 = vunpack.c.l.b16 %v3100
    %v3125 = vunpack.c.l.b16 %v3101
    %v3126 = vunpack.c.l.b16 %v3102
    %v3127 = vunpack.c.l.b16 %v3103
    %v3128 = vunpack.c.h.b16 %v3092
    %v3129 = vunpack.c.h.b16 %v3093
    %v3130 = vunpack.c.h.b16 %v3094
    %v3131 = vunpack.c.h.b16 %v3095
    %v3132 = vunpack.c.h.b16 %v3096
    %v3133 = vunpack.c.h.b16 %v3097
    %v3134 = vunpack.c.h.b16 %v3098
    %v3135 = vunpack.c.h.b16 %v3099
    %v3136 = vunpack.c.h.b16 %v3100
    %v3137 = vunpack.c.h.b16 %v3101
    %v3138 = vunpack.c.h.b16 %v3102
    %v3139 = vunpack.c.h.b16 %v3103
    %v3140 = vpack.c.b16 %v3117, %v3116
    %v3141 = vpack.c.b16 %v3119, %v3118
    %v3142 = vpack.c.b16 %v3121, %v3120
    %v3143 = vpack.c.b16 %v3123, %v3122
    %v3144 = vpack.c.b16 %v3125, %v3124
    %v3145 = vpack.c.b16 %v3127, %v3126
    %v3146 = vpack.c.b16 %v3129, %v3128
    %v3147 = vpack.c.b16 %v3131, %v3130
    %v3148 = vpack.c.b16 %v3133, %v3132
    %v3149 = vpack.c.b16 %v3135, %v3134
    %v3150 = vpack.c.b16 %v3137, %v3136
    %v3151 = vpack.c.b16 %v3139, %v3138
    %3164 = vst [vmem:[#allocation11] sm:$0xff] %v3140
    %3165 = vst [vmem:[#allocation11 + $0x8] sm:$0xff] %v3141
    %3166 = vst [vmem:[#allocation11 + $0x10] sm:$0xff] %v3142
    %3167 = vst [vmem:[#allocation11 + $0x18] sm:$0xff] %v3143
    %3168 = vst [vmem:[#allocation11 + $0x20] sm:$0xff] %v3144
    %3169 = vst [vmem:[#allocation11 + $0x28] sm:$0xff] %v3145
    %3170 = vst [vmem:[#allocation11 + $0x30] sm:$0xff] %v3146
    %3171 = vst [vmem:[#allocation11 + $0x38] sm:$0xff] %v3147
    %3172 = vst [vmem:[#allocation11 + $0x40] sm:$0xff] %v3148
    %3173 = vst [vmem:[#allocation11 + $0x48] sm:$0xff] %v3149
    %3174 = vst [vmem:[#allocation11 + $0x50] sm:$0xff] %v3150
    %3175 = vst [vmem:[#allocation11 + $0x58] sm:$0xff] %v3151
    // Predicated region
    $region42: #{tpu_custom_call.1} parent=1 // pred_check
      _
    $region43: #{tpu_custom_call.1} parent=1 // pred_check_branch
      %3177 = sbr.rel (0) target = $region45
    $region44: #{tpu_custom_call.1} parent=1 // pred_region
      %s3179 = ssub.s32 1536, 1536
      %3180 = vsyncadd [#allocation4], %s3179
      %s3181 = sshll.u32 [#allocation11], 4
      %s3182 = int_to_ptr.vmem [resolvable:$true] %s3181
      %3187 = dma.vmem_to_hbm [thread:$0]  %s3182, 1536, %s5, [#allocation4], 768, 768, 48
    $region45: #{tpu_custom_call.1} parent=1 // pred_fallthru
      _
    // Predicated region
    $region46: #{tpu_custom_call.1} parent=1 // pred_check
      _
    $region47: #{tpu_custom_call.1} parent=1 // pred_check_branch
      %3189 = sbr.rel (0) target = $region49
    $region48: #{tpu_custom_call.1} parent=1 // pred_region
      %3190 = dma.done [#allocation4], 1536
    $region49: #{tpu_custom_call.1} parent=1 // pred_fallthru
      _
    %3191 = vsyncpa [#allocation3], 1
    %3192 = vsyncpa [#allocation6], 1
    %3193 = vsyncpa [#allocation9], 1
    %3194 = vsyncpa [#allocation4], 1

</llo_original>
